<compile_context>
chip_gen: v5e
topology: v5e:2x2
jax: 0.10.0
libtpu: 0.0.40
codegen_flags: <defaults>
</compile_context>

<pallas_src>
import functools

import jax
import jax.numpy as jnp
from jax.experimental import pallas as pl
from jax.experimental.pallas import tpu as pltpu

INPUT_SIZE = 784
NUM_CLASSES = 10


def _round_up(x, m):
    return ((x + m - 1) // m) * m


def linear_kernel(x_ref, w_ref, b_ref, o_ref):
    # x_ref: (bm, K) f32, w_ref: (K, N_pad) f32, b_ref: (1, N_pad) f32
    acc = jnp.dot(
        x_ref[...],
        w_ref[...],
        preferred_element_type=jnp.float32,
        precision=jax.lax.Precision.HIGHEST,
    )
    o_ref[...] = (acc + b_ref[...]).astype(o_ref.dtype)


@functools.partial(jax.jit, static_argnames=("bm",))
def logistic_regression_forward(x, weight, bias, *, bm=512):
    """x: (B, input_size) f32; weight: (num_classes, input_size); bias: (num_classes,)."""
    B, K = x.shape
    N = weight.shape[0]

    # Lane-dense padded output width (10 -> 128): unmasked stores.
    N_pad = _round_up(max(N, 128), 128)

    # Batch tile: big for large B (amortizes ~0.35us/step), minimal for small B.
    bm_eff = min(bm, _round_up(B, 8))
    B_pad = _round_up(B, bm_eff)
    grid = B_pad // bm_eff

    # ---- wrapper-side glue (cheap: only batch-pad x rows, tiny W/b pads) ----
    x_p = x.astype(jnp.float32)
    if B_pad != B:
        x_p = jnp.pad(x_p, ((0, B_pad - B), (0, 0)))

    w_t = jnp.zeros((K, N_pad), dtype=jnp.float32)
    w_t = w_t.at[:, :N].set(weight.T.astype(jnp.float32))

    b2d = jnp.zeros((1, N_pad), dtype=jnp.float32)
    b2d = b2d.at[0, :N].set(bias.astype(jnp.float32))

    out_padded = pl.pallas_call(
        linear_kernel,
        out_shape=jax.ShapeDtypeStruct((B_pad, N_pad), jnp.float32),
        grid_spec=pltpu.PrefetchScalarGridSpec(
            num_scalar_prefetch=0,
            grid=(grid,),
            in_specs=[
                pl.BlockSpec((bm_eff, K), lambda i: (i, 0)),   # batch-tiled x (f32, unpadded K)
                pl.BlockSpec((K, N_pad), lambda i: (0, 0)),    # full transposed weight
                pl.BlockSpec((1, N_pad), lambda i: (0, 0)),    # bias row
            ],
            out_specs=pl.BlockSpec((bm_eff, N_pad), lambda i: (i, 0)),
        ),
        compiler_params=pltpu.CompilerParams(
            dimension_semantics=("parallel",),   # shards the batch grid across TCs on v7x
            vmem_limit_bytes=64 << 20,           # headroom for large bm, below v7x physical
        ),
    )(x_p, w_t, b2d)

    return out_padded[:B, :N].astype(x.dtype)


if __name__ == "__main__":
    key = jax.random.PRNGKey(0)
    kx, kw, kb = jax.random.split(key, 3)

    B = 8
    x = jax.random.normal(kx, (B, INPUT_SIZE), dtype=jnp.float32)

    # Deterministic parameter init mimicking nn.Linear: U(-1/sqrt(K), 1/sqrt(K))
    bound = 1.0 / (INPUT_SIZE ** 0.5)
    weight = jax.random.uniform(
        kw, (NUM_CLASSES, INPUT_SIZE), minval=-bound, maxval=bound, dtype=jnp.float32
    )
    bias = jax.random.uniform(
        kb, (NUM_CLASSES,), minval=-bound, maxval=bound, dtype=jnp.float32
    )

    out = logistic_regression_forward(x, weight, bias)
    out = jax.block_until_ready(out)

    # Reference with matching (full f32) precision.
    ref = jnp.dot(x, weight.T, precision=jax.lax.Precision.HIGHEST) + bias
    assert out.shape == (B, NUM_CLASSES)
    assert jnp.allclose(out, ref, atol=1e-4, rtol=1e-4), float(jnp.max(jnp.abs(out - ref)))
    print("KERNEL_OK")
</pallas_src>

<mosaic_0001>
module attributes {stable_mosaic.version = 11 : i64} {
  func.func @linear_kernel(%arg0: i32, %arg1: memref<8x784xf32, #tpu.memory_space<vmem>>, %arg2: memref<784x128xf32, #tpu.memory_space<vmem>>, %arg3: memref<1x128xf32, #tpu.memory_space<vmem>>, %arg4: memref<8x128xf32, #tpu.memory_space<vmem>>) attributes {dimension_semantics = [#tpu.dimension_semantics<parallel>], iteration_bounds = array<i64: 1>, scalar_prefetch = 0 : i64, scratch_operands = 0 : i64, tpu.core_type = #tpu.core_type<tc>, window_params = [{transform_indices = @transform_0, window_bounds = array<i64: 8, 784>}, {pipeline_mode = #tpu.pipeline_mode<synchronous>, transform_indices = @transform_1, window_bounds = array<i64: 784, 128>}, {pipeline_mode = #tpu.pipeline_mode<synchronous>, transform_indices = @transform_2, window_bounds = array<i64: 1, 128>}, {transform_indices = @transform_3, window_bounds = array<i64: 8, 128>}]} {
    %c0 = arith.constant 0 : index
    %c0_0 = arith.constant 0 : index
    %0 = vector.load %arg1[%c0, %c0_0] : memref<8x784xf32, #tpu.memory_space<vmem>>, vector<8x784xf32>
    %c0_1 = arith.constant 0 : index
    %c0_2 = arith.constant 0 : index
    %1 = vector.load %arg2[%c0_1, %c0_2] : memref<784x128xf32, #tpu.memory_space<vmem>>, vector<784x128xf32>
    %cst = arith.constant dense<0.000000e+00> : vector<8x128xf32>
    %2 = tpu.matmul %0, %1, %cst {dimension_numbers = #tpu.dot_dimension_numbers<[1], [0], [0], [1], [0, 0, 1, 1], [], []>, precision = #tpu.contract_precision<fp32>} : vector<8x784xf32>, vector<784x128xf32>, vector<8x128xf32> -> vector<8x128xf32>
    %c0_3 = arith.constant 0 : index
    %c0_4 = arith.constant 0 : index
    %3 = vector.load %arg3[%c0_3, %c0_4] : memref<1x128xf32, #tpu.memory_space<vmem>>, vector<1x128xf32>
    %4 = vector.broadcast %3 : vector<1x128xf32> to vector<8x128xf32>
    %5 = arith.addf %2, %4 : vector<8x128xf32>
    %c0_5 = arith.constant 0 : index
    %c0_6 = arith.constant 0 : index
    %6 = vector.load %arg4[%c0_5, %c0_6] : memref<8x128xf32, #tpu.memory_space<vmem>>, vector<8x128xf32>
    tpu.vector_store %arg4[%c0_5, %c0_6], %5 {strides = array<i32>} : memref<8x128xf32, #tpu.memory_space<vmem>>, vector<8x128xf32>,
    return
  }
  func.func @transform_0(%arg0: i32) -> (i32, i32) {
    %c0_i32 = arith.constant 0 : i32
    %c0_i32_0 = arith.constant 0 : i32
    return %arg0, %c0_i32 : i32, i32
  }
  func.func @transform_1(%arg0: i32) -> (i32, i32) {
    %c0_i32 = arith.constant 0 : i32
    %c0_i32_0 = arith.constant 0 : i32
    %c0_i32_1 = arith.constant 0 : i32
    return %c0_i32, %c0_i32_0 : i32, i32
  }
  func.func @transform_2(%arg0: i32) -> (i32, i32) {
    %c0_i32 = arith.constant 0 : i32
    %c0_i32_0 = arith.constant 0 : i32
    %c0_i32_1 = arith.constant 0 : i32
    return %c0_i32, %c0_i32_0 : i32, i32
  }
  func.func @transform_3(%arg0: i32) -> (i32, i32) {
    %c0_i32 = arith.constant 0 : i32
    %c0_i32_0 = arith.constant 0 : i32
    return %arg0, %c0_i32 : i32, i32
  }
}

</mosaic_0001>

<llo_original>
// kernel: logistic_regression_forward.1
$region0: #{logistic_regression_forward.1}
  #allocation0 [shape = 'u32[]', space=smem, size = 0x4, offset = 0x4, fixed_abs, tag = 'smem constant byte address 0x4 - core index']
  #allocation1 [shape = 'u32[72,128]{1,0:T(1,128)}', space=vmem, size = 0x9000, scoped, tag = 'internal scratch']
  %s0 = inlined_call_operand.vmem [shape: f32[8,784], index: 0, kind: input, shape index: {}]
  %s1 = inlined_call_operand.vmem [shape: f32[784,128], index: 1, kind: input, shape index: {}]
  %s2 = inlined_call_operand.vmem [shape: f32[1,128], index: 2, kind: input, shape index: {}]
  %s3 = inlined_call_operand.hbm [shape: f32[8,128], index: 3, kind: output, shape index: {}]
  %s4 = sld [smem:[#allocation0]]
  $region22: #{logistic_regression_forward.1} parent=0
    _
  %s6 = ssub.s32 1, %s4
  %s7 = scalar_select 0, %s6, %s4
  $region1: #{logistic_regression_forward.1} parent=0
    #allocation2 [shape = 'u8[4096]{0}', space=vmem, size = 0x1000, scoped, tag = 'output window, operand 0, single buffered']
    #allocation3 [shape = 's32[1]{0}', space=sflag, size = 0x4, scoped, tag = 'scoped memory for logistic_regression_forward.1']
    %8 = vsyncpa [#allocation3], 0
    // Predicated region
    $region2: #{logistic_regression_forward.1} parent=1 // pred_check
      _
    $region3: #{logistic_regression_forward.1} parent=1 // pred_check_branch
      %10 = sbr.rel (0) target = $region5
    $region4: #{logistic_regression_forward.1} parent=1 // pred_region
      _
    $region5: #{logistic_regression_forward.1} parent=1 // pred_fallthru
      _
    // Predicated region
    $region6: #{logistic_regression_forward.1} parent=1 // pred_check
      _
    $region7: #{logistic_regression_forward.1} parent=1 // pred_check_branch
      %12 = sbr.rel (0) target = $region9
    $region8: #{logistic_regression_forward.1} parent=1 // pred_region
      _
    $region9: #{logistic_regression_forward.1} parent=1 // pred_fallthru
      _
    // Predicated region
    $region10: #{logistic_regression_forward.1} parent=1 // pred_check
      _
    $region11: #{logistic_regression_forward.1} parent=1 // pred_check_branch
      %14 = sbr.rel (0) target = $region13
    $region12: #{logistic_regression_forward.1} parent=1 // pred_region
      _
    $region13: #{logistic_regression_forward.1} parent=1 // pred_fallthru
      _
    %v15 = vld [vmem:[%s0] sm:$0xff]
    %v16 = vld [vmem:[%s0 + $0x8] sm:$0xff]
    %v17 = vld [vmem:[%s0 + $0x10] sm:$0xff]
    %v18 = vld [vmem:[%s0 + $0x18] sm:$0xff]
    %v19 = vld [vmem:[%s0 + $0x20] sm:$0xff]
    %v20 = vld [vmem:[%s0 + $0x28] sm:$0xff]
    %v21 = vld [vmem:[%s0 + $0x30] sm:$0xff]
    %v22 = vld [vmem:[%s1] sm:$0xff]
    %v23 = vld [vmem:[%s1 + $0x8] sm:$0xff]
    %v24 = vld [vmem:[%s1 + $0x10] sm:$0xff]
    %v25 = vld [vmem:[%s1 + $0x18] sm:$0xff]
    %v26 = vld [vmem:[%s1 + $0x20] sm:$0xff]
    %v27 = vld [vmem:[%s1 + $0x28] sm:$0xff]
    %v28 = vld [vmem:[%s1 + $0x30] sm:$0xff]
    %v29 = vld [vmem:[%s1 + $0x38] sm:$0xff]
    %v30 = vld [vmem:[%s1 + $0x40] sm:$0xff]
    %v31 = vld [vmem:[%s1 + $0x48] sm:$0xff]
    %v32 = vld [vmem:[%s1 + $0x50] sm:$0xff]
    %v33 = vld [vmem:[%s1 + $0x58] sm:$0xff]
    %v34 = vld [vmem:[%s1 + $0x60] sm:$0xff]
    %v35 = vld [vmem:[%s1 + $0x68] sm:$0xff]
    %v36 = vld [vmem:[%s1 + $0x70] sm:$0xff]
    %v37 = vld [vmem:[%s1 + $0x78] sm:$0xff]
    %v38 = vld [vmem:[%s1 + $0x80] sm:$0xff]
    %v39 = vld [vmem:[%s1 + $0x88] sm:$0xff]
    %v40 = vld [vmem:[%s1 + $0x90] sm:$0xff]
    %v41 = vld [vmem:[%s1 + $0x98] sm:$0xff]
    %v42 = vld [vmem:[%s1 + $0xa0] sm:$0xff]
    %v43 = vld [vmem:[%s1 + $0xa8] sm:$0xff]
    %v44 = vld [vmem:[%s1 + $0xb0] sm:$0xff]
    %v45 = vld [vmem:[%s1 + $0xb8] sm:$0xff]
    %v46 = vld [vmem:[%s1 + $0xc0] sm:$0xff]
    %v47 = vld [vmem:[%s1 + $0xc8] sm:$0xff]
    %v48 = vld [vmem:[%s1 + $0xd0] sm:$0xff]
    %v49 = vld [vmem:[%s1 + $0xd8] sm:$0xff]
    %v50 = vld [vmem:[%s1 + $0xe0] sm:$0xff]
    %v51 = vld [vmem:[%s1 + $0xe8] sm:$0xff]
    %v52 = vld [vmem:[%s1 + $0xf0] sm:$0xff]
    %v53 = vld [vmem:[%s1 + $0xf8] sm:$0xff]
    %v54 = vld [vmem:[%s1 + $0x100] sm:$0xff]
    %v55 = vld [vmem:[%s1 + $0x108] sm:$0xff]
    %v56 = vld [vmem:[%s1 + $0x110] sm:$0xff]
    %v57 = vld [vmem:[%s1 + $0x118] sm:$0xff]
    %v58 = vld [vmem:[%s1 + $0x120] sm:$0xff]
    %v59 = vld [vmem:[%s1 + $0x128] sm:$0xff]
    %v60 = vld [vmem:[%s1 + $0x130] sm:$0xff]
    %v61 = vld [vmem:[%s1 + $0x138] sm:$0xff]
    %v62 = vld [vmem:[%s1 + $0x140] sm:$0xff]
    %v63 = vld [vmem:[%s1 + $0x148] sm:$0xff]
    %v64 = vld [vmem:[%s1 + $0x150] sm:$0xff]
    %v65 = vld [vmem:[%s1 + $0x158] sm:$0xff]
    %v66 = vld [vmem:[%s1 + $0x160] sm:$0xff]
    %v67 = vld [vmem:[%s1 + $0x168] sm:$0xff]
    %v68 = vld [vmem:[%s1 + $0x170] sm:$0xff]
    %v69 = vld [vmem:[%s1 + $0x178] sm:$0xff]
    %v70 = vld [vmem:[%s1 + $0x180] sm:$0xff]
    %v71 = vld [vmem:[%s1 + $0x188] sm:$0xff]
    %v72 = vld [vmem:[%s1 + $0x190] sm:$0xff]
    %v73 = vld [vmem:[%s1 + $0x198] sm:$0xff]
    %v74 = vld [vmem:[%s1 + $0x1a0] sm:$0xff]
    %v75 = vld [vmem:[%s1 + $0x1a8] sm:$0xff]
    %v76 = vld [vmem:[%s1 + $0x1b0] sm:$0xff]
    %v77 = vld [vmem:[%s1 + $0x1b8] sm:$0xff]
    %v78 = vld [vmem:[%s1 + $0x1c0] sm:$0xff]
    %v79 = vld [vmem:[%s1 + $0x1c8] sm:$0xff]
    %v80 = vld [vmem:[%s1 + $0x1d0] sm:$0xff]
    %v81 = vld [vmem:[%s1 + $0x1d8] sm:$0xff]
    %v82 = vld [vmem:[%s1 + $0x1e0] sm:$0xff]
    %v83 = vld [vmem:[%s1 + $0x1e8] sm:$0xff]
    %v84 = vld [vmem:[%s1 + $0x1f0] sm:$0xff]
    %v85 = vld [vmem:[%s1 + $0x1f8] sm:$0xff]
    %v86 = vld [vmem:[%s1 + $0x200] sm:$0xff]
    %v87 = vld [vmem:[%s1 + $0x208] sm:$0xff]
    %v88 = vld [vmem:[%s1 + $0x210] sm:$0xff]
    %v89 = vld [vmem:[%s1 + $0x218] sm:$0xff]
    %v90 = vld [vmem:[%s1 + $0x220] sm:$0xff]
    %v91 = vld [vmem:[%s1 + $0x228] sm:$0xff]
    %v92 = vld [vmem:[%s1 + $0x230] sm:$0xff]
    %v93 = vld [vmem:[%s1 + $0x238] sm:$0xff]
    %v94 = vld [vmem:[%s1 + $0x240] sm:$0xff]
    %v95 = vld [vmem:[%s1 + $0x248] sm:$0xff]
    %v96 = vld [vmem:[%s1 + $0x250] sm:$0xff]
    %v97 = vld [vmem:[%s1 + $0x258] sm:$0xff]
    %v98 = vld [vmem:[%s1 + $0x260] sm:$0xff]
    %v99 = vld [vmem:[%s1 + $0x268] sm:$0xff]
    %v100 = vld [vmem:[%s1 + $0x270] sm:$0xff]
    %v101 = vld [vmem:[%s1 + $0x278] sm:$0xff]
    %v102 = vld [vmem:[%s1 + $0x280] sm:$0xff]
    %v103 = vld [vmem:[%s1 + $0x288] sm:$0xff]
    %v104 = vld [vmem:[%s1 + $0x290] sm:$0xff]
    %v105 = vld [vmem:[%s1 + $0x298] sm:$0xff]
    %v106 = vld [vmem:[%s1 + $0x2a0] sm:$0xff]
    %v107 = vld [vmem:[%s1 + $0x2a8] sm:$0xff]
    %v108 = vld [vmem:[%s1 + $0x2b0] sm:$0xff]
    %v109 = vld [vmem:[%s1 + $0x2b8] sm:$0xff]
    %v110 = vld [vmem:[%s1 + $0x2c0] sm:$0xff]
    %v111 = vld [vmem:[%s1 + $0x2c8] sm:$0xff]
    %v112 = vld [vmem:[%s1 + $0x2d0] sm:$0xff]
    %v113 = vld [vmem:[%s1 + $0x2d8] sm:$0xff]
    %v114 = vld [vmem:[%s1 + $0x2e0] sm:$0xff]
    %v115 = vld [vmem:[%s1 + $0x2e8] sm:$0xff]
    %v116 = vld [vmem:[%s1 + $0x2f0] sm:$0xff]
    %v117 = vld [vmem:[%s1 + $0x2f8] sm:$0xff]
    %v118 = vld [vmem:[%s1 + $0x300] sm:$0xff]
    %v119 = vld [vmem:[%s1 + $0x308] sm:$0xff]
    %v120 = vld [vmem:[%s2] sm:$0x1]
    %v122 = vperm.slane %v120, 0
    %vm124 = vcmask 130048
    %v126 = vsel %vm124, %v21, 0
    %v128 = vand.u32 %v37, 4294901760
    %129 = vmatpush.msra.mxu0 %v128
    %v130 = vand.u32 %v36, 4294901760
    %131 = vmatpush.msra.mxu0 %v130
    %v132 = vand.u32 %v35, 4294901760
    %133 = vmatpush.msra.mxu0 %v132
    %v134 = vand.u32 %v34, 4294901760
    %135 = vmatpush.msra.mxu0 %v134
    %v136 = vand.u32 %v33, 4294901760
    %137 = vmatpush.msra.mxu0 %v136
    %v138 = vand.u32 %v32, 4294901760
    %139 = vmatpush.msra.mxu0 %v138
    %v140 = vand.u32 %v31, 4294901760
    %141 = vmatpush.msra.mxu0 %v140
    %v142 = vand.u32 %v30, 4294901760
    %143 = vmatpush.msra.mxu0 %v142
    %v144 = vand.u32 %v29, 4294901760
    %145 = vmatpush.msra.mxu0 %v144
    %v146 = vand.u32 %v28, 4294901760
    %147 = vmatpush.msra.mxu0 %v146
    %v148 = vand.u32 %v27, 4294901760
    %149 = vmatpush.msra.mxu0 %v148
    %v150 = vand.u32 %v26, 4294901760
    %151 = vmatpush.msra.mxu0 %v150
    %v152 = vand.u32 %v25, 4294901760
    %153 = vmatpush.msra.mxu0 %v152
    %v154 = vand.u32 %v24, 4294901760
    %155 = vmatpush.msra.mxu0 %v154
    %v156 = vand.u32 %v23, 4294901760
    %157 = vmatpush.msra.mxu0 %v156
    %v158 = vand.u32 %v22, 4294901760
    %159 = vmatpush.msra.mxu0 %v158
    %v160 = vand.u32 %v15, 4294901760
    %v161 = vsub.f32 %v15, %v160
    %v162 = vand.u32 %v161, 4294901760
    %v163 = vsub.f32 %v161, %v162
    %v164 = vand.u32 %v163, 4294901760
    %165 = vmatmul.f32.gmra.mxu0 %v164
    %v166 = vpop.f32.mrf.mxu0
    %v167 = vadd.f32 %v122, %v166
    %168 = vdwg.mxu0
    %v169 = vand.u32 %v37, 4294901760
    %v170 = vsub.f32 %v37, %v169
    %v171 = vand.u32 %v170, 4294901760
    %v172 = vsub.f32 %v170, %v171
    %v173 = vand.u32 %v172, 4294901760
    %174 = vmatpush.msra.mxu0 %v173
    %v175 = vand.u32 %v36, 4294901760
    %v176 = vsub.f32 %v36, %v175
    %v177 = vand.u32 %v176, 4294901760
    %v178 = vsub.f32 %v176, %v177
    %v179 = vand.u32 %v178, 4294901760
    %180 = vmatpush.msra.mxu0 %v179
    %v181 = vand.u32 %v35, 4294901760
    %v182 = vsub.f32 %v35, %v181
    %v183 = vand.u32 %v182, 4294901760
    %v184 = vsub.f32 %v182, %v183
    %v185 = vand.u32 %v184, 4294901760
    %186 = vmatpush.msra.mxu0 %v185
    %v187 = vand.u32 %v34, 4294901760
    %v188 = vsub.f32 %v34, %v187
    %v189 = vand.u32 %v188, 4294901760
    %v190 = vsub.f32 %v188, %v189
    %v191 = vand.u32 %v190, 4294901760
    %192 = vmatpush.msra.mxu0 %v191
    %v193 = vand.u32 %v33, 4294901760
    %v194 = vsub.f32 %v33, %v193
    %v195 = vand.u32 %v194, 4294901760
    %v196 = vsub.f32 %v194, %v195
    %v197 = vand.u32 %v196, 4294901760
    %198 = vmatpush.msra.mxu0 %v197
    %v199 = vand.u32 %v32, 4294901760
    %v200 = vsub.f32 %v32, %v199
    %v201 = vand.u32 %v200, 4294901760
    %v202 = vsub.f32 %v200, %v201
    %v203 = vand.u32 %v202, 4294901760
    %204 = vmatpush.msra.mxu0 %v203
    %v205 = vand.u32 %v31, 4294901760
    %v206 = vsub.f32 %v31, %v205
    %v207 = vand.u32 %v206, 4294901760
    %v208 = vsub.f32 %v206, %v207
    %v209 = vand.u32 %v208, 4294901760
    %210 = vmatpush.msra.mxu0 %v209
    %v211 = vand.u32 %v30, 4294901760
    %v212 = vsub.f32 %v30, %v211
    %v213 = vand.u32 %v212, 4294901760
    %v214 = vsub.f32 %v212, %v213
    %v215 = vand.u32 %v214, 4294901760
    %216 = vmatpush.msra.mxu0 %v215
    %v217 = vand.u32 %v29, 4294901760
    %v218 = vsub.f32 %v29, %v217
    %v219 = vand.u32 %v218, 4294901760
    %v220 = vsub.f32 %v218, %v219
    %v221 = vand.u32 %v220, 4294901760
    %222 = vmatpush.msra.mxu0 %v221
    %v223 = vand.u32 %v28, 4294901760
    %v224 = vsub.f32 %v28, %v223
    %v225 = vand.u32 %v224, 4294901760
    %v226 = vsub.f32 %v224, %v225
    %v227 = vand.u32 %v226, 4294901760
    %228 = vmatpush.msra.mxu0 %v227
    %v229 = vand.u32 %v27, 4294901760
    %v230 = vsub.f32 %v27, %v229
    %v231 = vand.u32 %v230, 4294901760
    %v232 = vsub.f32 %v230, %v231
    %v233 = vand.u32 %v232, 4294901760
    %234 = vmatpush.msra.mxu0 %v233
    %v235 = vand.u32 %v26, 4294901760
    %v236 = vsub.f32 %v26, %v235
    %v237 = vand.u32 %v236, 4294901760
    %v238 = vsub.f32 %v236, %v237
    %v239 = vand.u32 %v238, 4294901760
    %240 = vmatpush.msra.mxu0 %v239
    %v241 = vand.u32 %v25, 4294901760
    %v242 = vsub.f32 %v25, %v241
    %v243 = vand.u32 %v242, 4294901760
    %v244 = vsub.f32 %v242, %v243
    %v245 = vand.u32 %v244, 4294901760
    %246 = vmatpush.msra.mxu0 %v245
    %v247 = vand.u32 %v24, 4294901760
    %v248 = vsub.f32 %v24, %v247
    %v249 = vand.u32 %v248, 4294901760
    %v250 = vsub.f32 %v248, %v249
    %v251 = vand.u32 %v250, 4294901760
    %252 = vmatpush.msra.mxu0 %v251
    %v253 = vand.u32 %v23, 4294901760
    %v254 = vsub.f32 %v23, %v253
    %v255 = vand.u32 %v254, 4294901760
    %v256 = vsub.f32 %v254, %v255
    %v257 = vand.u32 %v256, 4294901760
    %258 = vmatpush.msra.mxu0 %v257
    %v259 = vand.u32 %v22, 4294901760
    %v260 = vsub.f32 %v22, %v259
    %v261 = vand.u32 %v260, 4294901760
    %v262 = vsub.f32 %v260, %v261
    %v263 = vand.u32 %v262, 4294901760
    %264 = vmatpush.msra.mxu0 %v263
    %v265 = vand.u32 %v15, 4294901760
    %266 = vmatmul.f32.gmra.mxu0 %v265
    %v267 = vpop.f32.mrf.mxu0
    %v268 = vadd.f32 %v167, %v267
    %269 = vdwg.mxu0
    %v270 = vand.u32 %v37, 4294901760
    %v271 = vsub.f32 %v37, %v270
    %272 = vmatpush.msra.mxu0 %v271
    %v273 = vand.u32 %v36, 4294901760
    %v274 = vsub.f32 %v36, %v273
    %275 = vmatpush.msra.mxu0 %v274
    %v276 = vand.u32 %v35, 4294901760
    %v277 = vsub.f32 %v35, %v276
    %278 = vmatpush.msra.mxu0 %v277
    %v279 = vand.u32 %v34, 4294901760
    %v280 = vsub.f32 %v34, %v279
    %281 = vmatpush.msra.mxu0 %v280
    %v282 = vand.u32 %v33, 4294901760
    %v283 = vsub.f32 %v33, %v282
    %284 = vmatpush.msra.mxu0 %v283
    %v285 = vand.u32 %v32, 4294901760
    %v286 = vsub.f32 %v32, %v285
    %287 = vmatpush.msra.mxu0 %v286
    %v288 = vand.u32 %v31, 4294901760
    %v289 = vsub.f32 %v31, %v288
    %290 = vmatpush.msra.mxu0 %v289
    %v291 = vand.u32 %v30, 4294901760
    %v292 = vsub.f32 %v30, %v291
    %293 = vmatpush.msra.mxu0 %v292
    %v294 = vand.u32 %v29, 4294901760
    %v295 = vsub.f32 %v29, %v294
    %296 = vmatpush.msra.mxu0 %v295
    %v297 = vand.u32 %v28, 4294901760
    %v298 = vsub.f32 %v28, %v297
    %299 = vmatpush.msra.mxu0 %v298
    %v300 = vand.u32 %v27, 4294901760
    %v301 = vsub.f32 %v27, %v300
    %302 = vmatpush.msra.mxu0 %v301
    %v303 = vand.u32 %v26, 4294901760
    %v304 = vsub.f32 %v26, %v303
    %305 = vmatpush.msra.mxu0 %v304
    %v306 = vand.u32 %v25, 4294901760
    %v307 = vsub.f32 %v25, %v306
    %308 = vmatpush.msra.mxu0 %v307
    %v309 = vand.u32 %v24, 4294901760
    %v310 = vsub.f32 %v24, %v309
    %311 = vmatpush.msra.mxu0 %v310
    %v312 = vand.u32 %v23, 4294901760
    %v313 = vsub.f32 %v23, %v312
    %314 = vmatpush.msra.mxu0 %v313
    %v315 = vand.u32 %v22, 4294901760
    %v316 = vsub.f32 %v22, %v315
    %317 = vmatpush.msra.mxu0 %v316
    %v318 = vand.u32 %v15, 4294901760
    %v319 = vsub.f32 %v15, %v318
    %320 = vmatmul.f32.gmra.mxu0 %v319
    %v321 = vpop.f32.mrf.mxu0
    %v322 = vadd.f32 %v268, %v321
    %323 = vdwg.mxu0
    %v324 = vand.u32 %v37, 4294901760
    %325 = vmatpush.msra.mxu0 %v324
    %v326 = vand.u32 %v36, 4294901760
    %327 = vmatpush.msra.mxu0 %v326
    %v328 = vand.u32 %v35, 4294901760
    %329 = vmatpush.msra.mxu0 %v328
    %v330 = vand.u32 %v34, 4294901760
    %331 = vmatpush.msra.mxu0 %v330
    %v332 = vand.u32 %v33, 4294901760
    %333 = vmatpush.msra.mxu0 %v332
    %v334 = vand.u32 %v32, 4294901760
    %335 = vmatpush.msra.mxu0 %v334
    %v336 = vand.u32 %v31, 4294901760
    %337 = vmatpush.msra.mxu0 %v336
    %v338 = vand.u32 %v30, 4294901760
    %339 = vmatpush.msra.mxu0 %v338
    %v340 = vand.u32 %v29, 4294901760
    %341 = vmatpush.msra.mxu0 %v340
    %v342 = vand.u32 %v28, 4294901760
    %343 = vmatpush.msra.mxu0 %v342
    %v344 = vand.u32 %v27, 4294901760
    %345 = vmatpush.msra.mxu0 %v344
    %v346 = vand.u32 %v26, 4294901760
    %347 = vmatpush.msra.mxu0 %v346
    %v348 = vand.u32 %v25, 4294901760
    %349 = vmatpush.msra.mxu0 %v348
    %v350 = vand.u32 %v24, 4294901760
    %351 = vmatpush.msra.mxu0 %v350
    %v352 = vand.u32 %v23, 4294901760
    %353 = vmatpush.msra.mxu0 %v352
    %v354 = vand.u32 %v22, 4294901760
    %355 = vmatpush.msra.mxu0 %v354
    %v356 = vand.u32 %v15, 4294901760
    %v357 = vsub.f32 %v15, %v356
    %v358 = vand.u32 %v357, 4294901760
    %359 = vmatmul.f32.gmra.mxu0 %v358
    %v360 = vpop.f32.mrf.mxu0
    %v361 = vadd.f32 %v322, %v360
    %362 = vdwg.mxu0
    %v363 = vand.u32 %v37, 4294901760
    %v364 = vsub.f32 %v37, %v363
    %v365 = vand.u32 %v364, 4294901760
    %366 = vmatpush.msra.mxu0 %v365
    %v367 = vand.u32 %v36, 4294901760
    %v368 = vsub.f32 %v36, %v367
    %v369 = vand.u32 %v368, 4294901760
    %370 = vmatpush.msra.mxu0 %v369
    %v371 = vand.u32 %v35, 4294901760
    %v372 = vsub.f32 %v35, %v371
    %v373 = vand.u32 %v372, 4294901760
    %374 = vmatpush.msra.mxu0 %v373
    %v375 = vand.u32 %v34, 4294901760
    %v376 = vsub.f32 %v34, %v375
    %v377 = vand.u32 %v376, 4294901760
    %378 = vmatpush.msra.mxu0 %v377
    %v379 = vand.u32 %v33, 4294901760
    %v380 = vsub.f32 %v33, %v379
    %v381 = vand.u32 %v380, 4294901760
    %382 = vmatpush.msra.mxu0 %v381
    %v383 = vand.u32 %v32, 4294901760
    %v384 = vsub.f32 %v32, %v383
    %v385 = vand.u32 %v384, 4294901760
    %386 = vmatpush.msra.mxu0 %v385
    %v387 = vand.u32 %v31, 4294901760
    %v388 = vsub.f32 %v31, %v387
    %v389 = vand.u32 %v388, 4294901760
    %390 = vmatpush.msra.mxu0 %v389
    %v391 = vand.u32 %v30, 4294901760
    %v392 = vsub.f32 %v30, %v391
    %v393 = vand.u32 %v392, 4294901760
    %394 = vmatpush.msra.mxu0 %v393
    %v395 = vand.u32 %v29, 4294901760
    %v396 = vsub.f32 %v29, %v395
    %v397 = vand.u32 %v396, 4294901760
    %398 = vmatpush.msra.mxu0 %v397
    %v399 = vand.u32 %v28, 4294901760
    %v400 = vsub.f32 %v28, %v399
    %v401 = vand.u32 %v400, 4294901760
    %402 = vmatpush.msra.mxu0 %v401
    %v403 = vand.u32 %v27, 4294901760
    %v404 = vsub.f32 %v27, %v403
    %v405 = vand.u32 %v404, 4294901760
    %406 = vmatpush.msra.mxu0 %v405
    %v407 = vand.u32 %v26, 4294901760
    %v408 = vsub.f32 %v26, %v407
    %v409 = vand.u32 %v408, 4294901760
    %410 = vmatpush.msra.mxu0 %v409
    %v411 = vand.u32 %v25, 4294901760
    %v412 = vsub.f32 %v25, %v411
    %v413 = vand.u32 %v412, 4294901760
    %414 = vmatpush.msra.mxu0 %v413
    %v415 = vand.u32 %v24, 4294901760
    %v416 = vsub.f32 %v24, %v415
    %v417 = vand.u32 %v416, 4294901760
    %418 = vmatpush.msra.mxu0 %v417
    %v419 = vand.u32 %v23, 4294901760
    %v420 = vsub.f32 %v23, %v419
    %v421 = vand.u32 %v420, 4294901760
    %422 = vmatpush.msra.mxu0 %v421
    %v423 = vand.u32 %v22, 4294901760
    %v424 = vsub.f32 %v22, %v423
    %v425 = vand.u32 %v424, 4294901760
    %426 = vmatpush.msra.mxu0 %v425
    %v427 = vand.u32 %v15, 4294901760
    %428 = vmatmul.f32.gmra.mxu0 %v427
    %v429 = vpop.f32.mrf.mxu0
    %v430 = vadd.f32 %v361, %v429
    %431 = vdwg.mxu0
    %v432 = vand.u32 %v37, 4294901760
    %433 = vmatpush.msra.mxu0 %v432
    %v434 = vand.u32 %v36, 4294901760
    %435 = vmatpush.msra.mxu0 %v434
    %v436 = vand.u32 %v35, 4294901760
    %437 = vmatpush.msra.mxu0 %v436
    %v438 = vand.u32 %v34, 4294901760
    %439 = vmatpush.msra.mxu0 %v438
    %v440 = vand.u32 %v33, 4294901760
    %441 = vmatpush.msra.mxu0 %v440
    %v442 = vand.u32 %v32, 4294901760
    %443 = vmatpush.msra.mxu0 %v442
    %v444 = vand.u32 %v31, 4294901760
    %445 = vmatpush.msra.mxu0 %v444
    %v446 = vand.u32 %v30, 4294901760
    %447 = vmatpush.msra.mxu0 %v446
    %v448 = vand.u32 %v29, 4294901760
    %449 = vmatpush.msra.mxu0 %v448
    %v450 = vand.u32 %v28, 4294901760
    %451 = vmatpush.msra.mxu0 %v450
    %v452 = vand.u32 %v27, 4294901760
    %453 = vmatpush.msra.mxu0 %v452
    %v454 = vand.u32 %v26, 4294901760
    %455 = vmatpush.msra.mxu0 %v454
    %v456 = vand.u32 %v25, 4294901760
    %457 = vmatpush.msra.mxu0 %v456
    %v458 = vand.u32 %v24, 4294901760
    %459 = vmatpush.msra.mxu0 %v458
    %v460 = vand.u32 %v23, 4294901760
    %461 = vmatpush.msra.mxu0 %v460
    %v462 = vand.u32 %v22, 4294901760
    %463 = vmatpush.msra.mxu0 %v462
    %v464 = vand.u32 %v15, 4294901760
    %465 = vmatmul.f32.gmra.mxu0 %v464
    %v466 = vpop.f32.mrf.mxu0
    %v467 = vadd.f32 %v430, %v466
    %468 = vdwg.mxu0
    %v469 = vand.u32 %v53, 4294901760
    %470 = vmatpush.msra.mxu0 %v469
    %v471 = vand.u32 %v52, 4294901760
    %472 = vmatpush.msra.mxu0 %v471
    %v473 = vand.u32 %v51, 4294901760
    %474 = vmatpush.msra.mxu0 %v473
    %v475 = vand.u32 %v50, 4294901760
    %476 = vmatpush.msra.mxu0 %v475
    %v477 = vand.u32 %v49, 4294901760
    %478 = vmatpush.msra.mxu0 %v477
    %v479 = vand.u32 %v48, 4294901760
    %480 = vmatpush.msra.mxu0 %v479
    %v481 = vand.u32 %v47, 4294901760
    %482 = vmatpush.msra.mxu0 %v481
    %v483 = vand.u32 %v46, 4294901760
    %484 = vmatpush.msra.mxu0 %v483
    %v485 = vand.u32 %v45, 4294901760
    %486 = vmatpush.msra.mxu0 %v485
    %v487 = vand.u32 %v44, 4294901760
    %488 = vmatpush.msra.mxu0 %v487
    %v489 = vand.u32 %v43, 4294901760
    %490 = vmatpush.msra.mxu0 %v489
    %v491 = vand.u32 %v42, 4294901760
    %492 = vmatpush.msra.mxu0 %v491
    %v493 = vand.u32 %v41, 4294901760
    %494 = vmatpush.msra.mxu0 %v493
    %v495 = vand.u32 %v40, 4294901760
    %496 = vmatpush.msra.mxu0 %v495
    %v497 = vand.u32 %v39, 4294901760
    %498 = vmatpush.msra.mxu0 %v497
    %v499 = vand.u32 %v38, 4294901760
    %500 = vmatpush.msra.mxu0 %v499
    %v501 = vand.u32 %v16, 4294901760
    %v502 = vsub.f32 %v16, %v501
    %v503 = vand.u32 %v502, 4294901760
    %v504 = vsub.f32 %v502, %v503
    %v505 = vand.u32 %v504, 4294901760
    %506 = vmatmul.f32.gmra.mxu0 %v505
    %v507 = vpop.f32.mrf.mxu0
    %v508 = vadd.f32 %v467, %v507
    %509 = vdwg.mxu0
    %v510 = vand.u32 %v53, 4294901760
    %v511 = vsub.f32 %v53, %v510
    %v512 = vand.u32 %v511, 4294901760
    %v513 = vsub.f32 %v511, %v512
    %v514 = vand.u32 %v513, 4294901760
    %515 = vmatpush.msra.mxu0 %v514
    %v516 = vand.u32 %v52, 4294901760
    %v517 = vsub.f32 %v52, %v516
    %v518 = vand.u32 %v517, 4294901760
    %v519 = vsub.f32 %v517, %v518
    %v520 = vand.u32 %v519, 4294901760
    %521 = vmatpush.msra.mxu0 %v520
    %v522 = vand.u32 %v51, 4294901760
    %v523 = vsub.f32 %v51, %v522
    %v524 = vand.u32 %v523, 4294901760
    %v525 = vsub.f32 %v523, %v524
    %v526 = vand.u32 %v525, 4294901760
    %527 = vmatpush.msra.mxu0 %v526
    %v528 = vand.u32 %v50, 4294901760
    %v529 = vsub.f32 %v50, %v528
    %v530 = vand.u32 %v529, 4294901760
    %v531 = vsub.f32 %v529, %v530
    %v532 = vand.u32 %v531, 4294901760
    %533 = vmatpush.msra.mxu0 %v532
    %v534 = vand.u32 %v49, 4294901760
    %v535 = vsub.f32 %v49, %v534
    %v536 = vand.u32 %v535, 4294901760
    %v537 = vsub.f32 %v535, %v536
    %v538 = vand.u32 %v537, 4294901760
    %539 = vmatpush.msra.mxu0 %v538
    %v540 = vand.u32 %v48, 4294901760
    %v541 = vsub.f32 %v48, %v540
    %v542 = vand.u32 %v541, 4294901760
    %v543 = vsub.f32 %v541, %v542
    %v544 = vand.u32 %v543, 4294901760
    %545 = vmatpush.msra.mxu0 %v544
    %v546 = vand.u32 %v47, 4294901760
    %v547 = vsub.f32 %v47, %v546
    %v548 = vand.u32 %v547, 4294901760
    %v549 = vsub.f32 %v547, %v548
    %v550 = vand.u32 %v549, 4294901760
    %551 = vmatpush.msra.mxu0 %v550
    %v552 = vand.u32 %v46, 4294901760
    %v553 = vsub.f32 %v46, %v552
    %v554 = vand.u32 %v553, 4294901760
    %v555 = vsub.f32 %v553, %v554
    %v556 = vand.u32 %v555, 4294901760
    %557 = vmatpush.msra.mxu0 %v556
    %v558 = vand.u32 %v45, 4294901760
    %v559 = vsub.f32 %v45, %v558
    %v560 = vand.u32 %v559, 4294901760
    %v561 = vsub.f32 %v559, %v560
    %v562 = vand.u32 %v561, 4294901760
    %563 = vmatpush.msra.mxu0 %v562
    %v564 = vand.u32 %v44, 4294901760
    %v565 = vsub.f32 %v44, %v564
    %v566 = vand.u32 %v565, 4294901760
    %v567 = vsub.f32 %v565, %v566
    %v568 = vand.u32 %v567, 4294901760
    %569 = vmatpush.msra.mxu0 %v568
    %v570 = vand.u32 %v43, 4294901760
    %v571 = vsub.f32 %v43, %v570
    %v572 = vand.u32 %v571, 4294901760
    %v573 = vsub.f32 %v571, %v572
    %v574 = vand.u32 %v573, 4294901760
    %575 = vmatpush.msra.mxu0 %v574
    %v576 = vand.u32 %v42, 4294901760
    %v577 = vsub.f32 %v42, %v576
    %v578 = vand.u32 %v577, 4294901760
    %v579 = vsub.f32 %v577, %v578
    %v580 = vand.u32 %v579, 4294901760
    %581 = vmatpush.msra.mxu0 %v580
    %v582 = vand.u32 %v41, 4294901760
    %v583 = vsub.f32 %v41, %v582
    %v584 = vand.u32 %v583, 4294901760
    %v585 = vsub.f32 %v583, %v584
    %v586 = vand.u32 %v585, 4294901760
    %587 = vmatpush.msra.mxu0 %v586
    %v588 = vand.u32 %v40, 4294901760
    %v589 = vsub.f32 %v40, %v588
    %v590 = vand.u32 %v589, 4294901760
    %v591 = vsub.f32 %v589, %v590
    %v592 = vand.u32 %v591, 4294901760
    %593 = vmatpush.msra.mxu0 %v592
    %v594 = vand.u32 %v39, 4294901760
    %v595 = vsub.f32 %v39, %v594
    %v596 = vand.u32 %v595, 4294901760
    %v597 = vsub.f32 %v595, %v596
    %v598 = vand.u32 %v597, 4294901760
    %599 = vmatpush.msra.mxu0 %v598
    %v600 = vand.u32 %v38, 4294901760
    %v601 = vsub.f32 %v38, %v600
    %v602 = vand.u32 %v601, 4294901760
    %v603 = vsub.f32 %v601, %v602
    %v604 = vand.u32 %v603, 4294901760
    %605 = vmatpush.msra.mxu0 %v604
    %v606 = vand.u32 %v16, 4294901760
    %607 = vmatmul.f32.gmra.mxu0 %v606
    %v608 = vpop.f32.mrf.mxu0
    %v609 = vadd.f32 %v508, %v608
    %610 = vdwg.mxu0
    %v611 = vand.u32 %v53, 4294901760
    %v612 = vsub.f32 %v53, %v611
    %613 = vmatpush.msra.mxu0 %v612
    %v614 = vand.u32 %v52, 4294901760
    %v615 = vsub.f32 %v52, %v614
    %616 = vmatpush.msra.mxu0 %v615
    %v617 = vand.u32 %v51, 4294901760
    %v618 = vsub.f32 %v51, %v617
    %619 = vmatpush.msra.mxu0 %v618
    %v620 = vand.u32 %v50, 4294901760
    %v621 = vsub.f32 %v50, %v620
    %622 = vmatpush.msra.mxu0 %v621
    %v623 = vand.u32 %v49, 4294901760
    %v624 = vsub.f32 %v49, %v623
    %625 = vmatpush.msra.mxu0 %v624
    %v626 = vand.u32 %v48, 4294901760
    %v627 = vsub.f32 %v48, %v626
    %628 = vmatpush.msra.mxu0 %v627
    %v629 = vand.u32 %v47, 4294901760
    %v630 = vsub.f32 %v47, %v629
    %631 = vmatpush.msra.mxu0 %v630
    %v632 = vand.u32 %v46, 4294901760
    %v633 = vsub.f32 %v46, %v632
    %634 = vmatpush.msra.mxu0 %v633
    %v635 = vand.u32 %v45, 4294901760
    %v636 = vsub.f32 %v45, %v635
    %637 = vmatpush.msra.mxu0 %v636
    %v638 = vand.u32 %v44, 4294901760
    %v639 = vsub.f32 %v44, %v638
    %640 = vmatpush.msra.mxu0 %v639
    %v641 = vand.u32 %v43, 4294901760
    %v642 = vsub.f32 %v43, %v641
    %643 = vmatpush.msra.mxu0 %v642
    %v644 = vand.u32 %v42, 4294901760
    %v645 = vsub.f32 %v42, %v644
    %646 = vmatpush.msra.mxu0 %v645
    %v647 = vand.u32 %v41, 4294901760
    %v648 = vsub.f32 %v41, %v647
    %649 = vmatpush.msra.mxu0 %v648
    %v650 = vand.u32 %v40, 4294901760
    %v651 = vsub.f32 %v40, %v650
    %652 = vmatpush.msra.mxu0 %v651
    %v653 = vand.u32 %v39, 4294901760
    %v654 = vsub.f32 %v39, %v653
    %655 = vmatpush.msra.mxu0 %v654
    %v656 = vand.u32 %v38, 4294901760
    %v657 = vsub.f32 %v38, %v656
    %658 = vmatpush.msra.mxu0 %v657
    %v659 = vand.u32 %v16, 4294901760
    %v660 = vsub.f32 %v16, %v659
    %661 = vmatmul.f32.gmra.mxu0 %v660
    %v662 = vpop.f32.mrf.mxu0
    %v663 = vadd.f32 %v609, %v662
    %664 = vdwg.mxu0
    %v665 = vand.u32 %v53, 4294901760
    %666 = vmatpush.msra.mxu0 %v665
    %v667 = vand.u32 %v52, 4294901760
    %668 = vmatpush.msra.mxu0 %v667
    %v669 = vand.u32 %v51, 4294901760
    %670 = vmatpush.msra.mxu0 %v669
    %v671 = vand.u32 %v50, 4294901760
    %672 = vmatpush.msra.mxu0 %v671
    %v673 = vand.u32 %v49, 4294901760
    %674 = vmatpush.msra.mxu0 %v673
    %v675 = vand.u32 %v48, 4294901760
    %676 = vmatpush.msra.mxu0 %v675
    %v677 = vand.u32 %v47, 4294901760
    %678 = vmatpush.msra.mxu0 %v677
    %v679 = vand.u32 %v46, 4294901760
    %680 = vmatpush.msra.mxu0 %v679
    %v681 = vand.u32 %v45, 4294901760
    %682 = vmatpush.msra.mxu0 %v681
    %v683 = vand.u32 %v44, 4294901760
    %684 = vmatpush.msra.mxu0 %v683
    %v685 = vand.u32 %v43, 4294901760
    %686 = vmatpush.msra.mxu0 %v685
    %v687 = vand.u32 %v42, 4294901760
    %688 = vmatpush.msra.mxu0 %v687
    %v689 = vand.u32 %v41, 4294901760
    %690 = vmatpush.msra.mxu0 %v689
    %v691 = vand.u32 %v40, 4294901760
    %692 = vmatpush.msra.mxu0 %v691
    %v693 = vand.u32 %v39, 4294901760
    %694 = vmatpush.msra.mxu0 %v693
    %v695 = vand.u32 %v38, 4294901760
    %696 = vmatpush.msra.mxu0 %v695
    %v697 = vand.u32 %v16, 4294901760
    %v698 = vsub.f32 %v16, %v697
    %v699 = vand.u32 %v698, 4294901760
    %700 = vmatmul.f32.gmra.mxu0 %v699
    %v701 = vpop.f32.mrf.mxu0
    %v702 = vadd.f32 %v663, %v701
    %703 = vdwg.mxu0
    %v704 = vand.u32 %v53, 4294901760
    %v705 = vsub.f32 %v53, %v704
    %v706 = vand.u32 %v705, 4294901760
    %707 = vmatpush.msra.mxu0 %v706
    %v708 = vand.u32 %v52, 4294901760
    %v709 = vsub.f32 %v52, %v708
    %v710 = vand.u32 %v709, 4294901760
    %711 = vmatpush.msra.mxu0 %v710
    %v712 = vand.u32 %v51, 4294901760
    %v713 = vsub.f32 %v51, %v712
    %v714 = vand.u32 %v713, 4294901760
    %715 = vmatpush.msra.mxu0 %v714
    %v716 = vand.u32 %v50, 4294901760
    %v717 = vsub.f32 %v50, %v716
    %v718 = vand.u32 %v717, 4294901760
    %719 = vmatpush.msra.mxu0 %v718
    %v720 = vand.u32 %v49, 4294901760
    %v721 = vsub.f32 %v49, %v720
    %v722 = vand.u32 %v721, 4294901760
    %723 = vmatpush.msra.mxu0 %v722
    %v724 = vand.u32 %v48, 4294901760
    %v725 = vsub.f32 %v48, %v724
    %v726 = vand.u32 %v725, 4294901760
    %727 = vmatpush.msra.mxu0 %v726
    %v728 = vand.u32 %v47, 4294901760
    %v729 = vsub.f32 %v47, %v728
    %v730 = vand.u32 %v729, 4294901760
    %731 = vmatpush.msra.mxu0 %v730
    %v732 = vand.u32 %v46, 4294901760
    %v733 = vsub.f32 %v46, %v732
    %v734 = vand.u32 %v733, 4294901760
    %735 = vmatpush.msra.mxu0 %v734
    %v736 = vand.u32 %v45, 4294901760
    %v737 = vsub.f32 %v45, %v736
    %v738 = vand.u32 %v737, 4294901760
    %739 = vmatpush.msra.mxu0 %v738
    %v740 = vand.u32 %v44, 4294901760
    %v741 = vsub.f32 %v44, %v740
    %v742 = vand.u32 %v741, 4294901760
    %743 = vmatpush.msra.mxu0 %v742
    %v744 = vand.u32 %v43, 4294901760
    %v745 = vsub.f32 %v43, %v744
    %v746 = vand.u32 %v745, 4294901760
    %747 = vmatpush.msra.mxu0 %v746
    %v748 = vand.u32 %v42, 4294901760
    %v749 = vsub.f32 %v42, %v748
    %v750 = vand.u32 %v749, 4294901760
    %751 = vmatpush.msra.mxu0 %v750
    %v752 = vand.u32 %v41, 4294901760
    %v753 = vsub.f32 %v41, %v752
    %v754 = vand.u32 %v753, 4294901760
    %755 = vmatpush.msra.mxu0 %v754
    %v756 = vand.u32 %v40, 4294901760
    %v757 = vsub.f32 %v40, %v756
    %v758 = vand.u32 %v757, 4294901760
    %759 = vmatpush.msra.mxu0 %v758
    %v760 = vand.u32 %v39, 4294901760
    %v761 = vsub.f32 %v39, %v760
    %v762 = vand.u32 %v761, 4294901760
    %763 = vmatpush.msra.mxu0 %v762
    %v764 = vand.u32 %v38, 4294901760
    %v765 = vsub.f32 %v38, %v764
    %v766 = vand.u32 %v765, 4294901760
    %767 = vmatpush.msra.mxu0 %v766
    %v768 = vand.u32 %v16, 4294901760
    %769 = vmatmul.f32.gmra.mxu0 %v768
    %v770 = vpop.f32.mrf.mxu0
    %v771 = vadd.f32 %v702, %v770
    %772 = vdwg.mxu0
    %v773 = vand.u32 %v53, 4294901760
    %774 = vmatpush.msra.mxu0 %v773
    %v775 = vand.u32 %v52, 4294901760
    %776 = vmatpush.msra.mxu0 %v775
    %v777 = vand.u32 %v51, 4294901760
    %778 = vmatpush.msra.mxu0 %v777
    %v779 = vand.u32 %v50, 4294901760
    %780 = vmatpush.msra.mxu0 %v779
    %v781 = vand.u32 %v49, 4294901760
    %782 = vmatpush.msra.mxu0 %v781
    %v783 = vand.u32 %v48, 4294901760
    %784 = vmatpush.msra.mxu0 %v783
    %v785 = vand.u32 %v47, 4294901760
    %786 = vmatpush.msra.mxu0 %v785
    %v787 = vand.u32 %v46, 4294901760
    %788 = vmatpush.msra.mxu0 %v787
    %v789 = vand.u32 %v45, 4294901760
    %790 = vmatpush.msra.mxu0 %v789
    %v791 = vand.u32 %v44, 4294901760
    %792 = vmatpush.msra.mxu0 %v791
    %v793 = vand.u32 %v43, 4294901760
    %794 = vmatpush.msra.mxu0 %v793
    %v795 = vand.u32 %v42, 4294901760
    %796 = vmatpush.msra.mxu0 %v795
    %v797 = vand.u32 %v41, 4294901760
    %798 = vmatpush.msra.mxu0 %v797
    %v799 = vand.u32 %v40, 4294901760
    %800 = vmatpush.msra.mxu0 %v799
    %v801 = vand.u32 %v39, 4294901760
    %802 = vmatpush.msra.mxu0 %v801
    %v803 = vand.u32 %v38, 4294901760
    %804 = vmatpush.msra.mxu0 %v803
    %v805 = vand.u32 %v16, 4294901760
    %806 = vmatmul.f32.gmra.mxu0 %v805
    %v807 = vpop.f32.mrf.mxu0
    %v808 = vadd.f32 %v771, %v807
    %809 = vdwg.mxu0
    %v810 = vand.u32 %v69, 4294901760
    %811 = vmatpush.msra.mxu0 %v810
    %v812 = vand.u32 %v68, 4294901760
    %813 = vmatpush.msra.mxu0 %v812
    %v814 = vand.u32 %v67, 4294901760
    %815 = vmatpush.msra.mxu0 %v814
    %v816 = vand.u32 %v66, 4294901760
    %817 = vmatpush.msra.mxu0 %v816
    %v818 = vand.u32 %v65, 4294901760
    %819 = vmatpush.msra.mxu0 %v818
    %v820 = vand.u32 %v64, 4294901760
    %821 = vmatpush.msra.mxu0 %v820
    %v822 = vand.u32 %v63, 4294901760
    %823 = vmatpush.msra.mxu0 %v822
    %v824 = vand.u32 %v62, 4294901760
    %825 = vmatpush.msra.mxu0 %v824
    %v826 = vand.u32 %v61, 4294901760
    %827 = vmatpush.msra.mxu0 %v826
    %v828 = vand.u32 %v60, 4294901760
    %829 = vmatpush.msra.mxu0 %v828
    %v830 = vand.u32 %v59, 4294901760
    %831 = vmatpush.msra.mxu0 %v830
    %v832 = vand.u32 %v58, 4294901760
    %833 = vmatpush.msra.mxu0 %v832
    %v834 = vand.u32 %v57, 4294901760
    %835 = vmatpush.msra.mxu0 %v834
    %v836 = vand.u32 %v56, 4294901760
    %837 = vmatpush.msra.mxu0 %v836
    %v838 = vand.u32 %v55, 4294901760
    %839 = vmatpush.msra.mxu0 %v838
    %v840 = vand.u32 %v54, 4294901760
    %841 = vmatpush.msra.mxu0 %v840
    %v842 = vand.u32 %v17, 4294901760
    %v843 = vsub.f32 %v17, %v842
    %v844 = vand.u32 %v843, 4294901760
    %v845 = vsub.f32 %v843, %v844
    %v846 = vand.u32 %v845, 4294901760
    %847 = vmatmul.f32.gmra.mxu0 %v846
    %v848 = vpop.f32.mrf.mxu0
    %v849 = vadd.f32 %v808, %v848
    %850 = vdwg.mxu0
    %v851 = vand.u32 %v69, 4294901760
    %v852 = vsub.f32 %v69, %v851
    %v853 = vand.u32 %v852, 4294901760
    %v854 = vsub.f32 %v852, %v853
    %v855 = vand.u32 %v854, 4294901760
    %856 = vmatpush.msra.mxu0 %v855
    %v857 = vand.u32 %v68, 4294901760
    %v858 = vsub.f32 %v68, %v857
    %v859 = vand.u32 %v858, 4294901760
    %v860 = vsub.f32 %v858, %v859
    %v861 = vand.u32 %v860, 4294901760
    %862 = vmatpush.msra.mxu0 %v861
    %v863 = vand.u32 %v67, 4294901760
    %v864 = vsub.f32 %v67, %v863
    %v865 = vand.u32 %v864, 4294901760
    %v866 = vsub.f32 %v864, %v865
    %v867 = vand.u32 %v866, 4294901760
    %868 = vmatpush.msra.mxu0 %v867
    %v869 = vand.u32 %v66, 4294901760
    %v870 = vsub.f32 %v66, %v869
    %v871 = vand.u32 %v870, 4294901760
    %v872 = vsub.f32 %v870, %v871
    %v873 = vand.u32 %v872, 4294901760
    %874 = vmatpush.msra.mxu0 %v873
    %v875 = vand.u32 %v65, 4294901760
    %v876 = vsub.f32 %v65, %v875
    %v877 = vand.u32 %v876, 4294901760
    %v878 = vsub.f32 %v876, %v877
    %v879 = vand.u32 %v878, 4294901760
    %880 = vmatpush.msra.mxu0 %v879
    %v881 = vand.u32 %v64, 4294901760
    %v882 = vsub.f32 %v64, %v881
    %v883 = vand.u32 %v882, 4294901760
    %v884 = vsub.f32 %v882, %v883
    %v885 = vand.u32 %v884, 4294901760
    %886 = vmatpush.msra.mxu0 %v885
    %v887 = vand.u32 %v63, 4294901760
    %v888 = vsub.f32 %v63, %v887
    %v889 = vand.u32 %v888, 4294901760
    %v890 = vsub.f32 %v888, %v889
    %v891 = vand.u32 %v890, 4294901760
    %892 = vmatpush.msra.mxu0 %v891
    %v893 = vand.u32 %v62, 4294901760
    %v894 = vsub.f32 %v62, %v893
    %v895 = vand.u32 %v894, 4294901760
    %v896 = vsub.f32 %v894, %v895
    %v897 = vand.u32 %v896, 4294901760
    %898 = vmatpush.msra.mxu0 %v897
    %v899 = vand.u32 %v61, 4294901760
    %v900 = vsub.f32 %v61, %v899
    %v901 = vand.u32 %v900, 4294901760
    %v902 = vsub.f32 %v900, %v901
    %v903 = vand.u32 %v902, 4294901760
    %904 = vmatpush.msra.mxu0 %v903
    %v905 = vand.u32 %v60, 4294901760
    %v906 = vsub.f32 %v60, %v905
    %v907 = vand.u32 %v906, 4294901760
    %v908 = vsub.f32 %v906, %v907
    %v909 = vand.u32 %v908, 4294901760
    %910 = vmatpush.msra.mxu0 %v909
    %v911 = vand.u32 %v59, 4294901760
    %v912 = vsub.f32 %v59, %v911
    %v913 = vand.u32 %v912, 4294901760
    %v914 = vsub.f32 %v912, %v913
    %v915 = vand.u32 %v914, 4294901760
    %916 = vmatpush.msra.mxu0 %v915
    %v917 = vand.u32 %v58, 4294901760
    %v918 = vsub.f32 %v58, %v917
    %v919 = vand.u32 %v918, 4294901760
    %v920 = vsub.f32 %v918, %v919
    %v921 = vand.u32 %v920, 4294901760
    %922 = vmatpush.msra.mxu0 %v921
    %v923 = vand.u32 %v57, 4294901760
    %v924 = vsub.f32 %v57, %v923
    %v925 = vand.u32 %v924, 4294901760
    %v926 = vsub.f32 %v924, %v925
    %v927 = vand.u32 %v926, 4294901760
    %928 = vmatpush.msra.mxu0 %v927
    %v929 = vand.u32 %v56, 4294901760
    %v930 = vsub.f32 %v56, %v929
    %v931 = vand.u32 %v930, 4294901760
    %v932 = vsub.f32 %v930, %v931
    %v933 = vand.u32 %v932, 4294901760
    %934 = vmatpush.msra.mxu0 %v933
    %v935 = vand.u32 %v55, 4294901760
    %v936 = vsub.f32 %v55, %v935
    %v937 = vand.u32 %v936, 4294901760
    %v938 = vsub.f32 %v936, %v937
    %v939 = vand.u32 %v938, 4294901760
    %940 = vmatpush.msra.mxu0 %v939
    %v941 = vand.u32 %v54, 4294901760
    %v942 = vsub.f32 %v54, %v941
    %v943 = vand.u32 %v942, 4294901760
    %v944 = vsub.f32 %v942, %v943
    %v945 = vand.u32 %v944, 4294901760
    %946 = vmatpush.msra.mxu0 %v945
    %v947 = vand.u32 %v17, 4294901760
    %948 = vmatmul.f32.gmra.mxu0 %v947
    %v949 = vpop.f32.mrf.mxu0
    %v950 = vadd.f32 %v849, %v949
    %951 = vdwg.mxu0
    %v952 = vand.u32 %v69, 4294901760
    %v953 = vsub.f32 %v69, %v952
    %954 = vmatpush.msra.mxu0 %v953
    %v955 = vand.u32 %v68, 4294901760
    %v956 = vsub.f32 %v68, %v955
    %957 = vmatpush.msra.mxu0 %v956
    %v958 = vand.u32 %v67, 4294901760
    %v959 = vsub.f32 %v67, %v958
    %960 = vmatpush.msra.mxu0 %v959
    %v961 = vand.u32 %v66, 4294901760
    %v962 = vsub.f32 %v66, %v961
    %963 = vmatpush.msra.mxu0 %v962
    %v964 = vand.u32 %v65, 4294901760
    %v965 = vsub.f32 %v65, %v964
    %966 = vmatpush.msra.mxu0 %v965
    %v967 = vand.u32 %v64, 4294901760
    %v968 = vsub.f32 %v64, %v967
    %969 = vmatpush.msra.mxu0 %v968
    %v970 = vand.u32 %v63, 4294901760
    %v971 = vsub.f32 %v63, %v970
    %972 = vmatpush.msra.mxu0 %v971
    %v973 = vand.u32 %v62, 4294901760
    %v974 = vsub.f32 %v62, %v973
    %975 = vmatpush.msra.mxu0 %v974
    %v976 = vand.u32 %v61, 4294901760
    %v977 = vsub.f32 %v61, %v976
    %978 = vmatpush.msra.mxu0 %v977
    %v979 = vand.u32 %v60, 4294901760
    %v980 = vsub.f32 %v60, %v979
    %981 = vmatpush.msra.mxu0 %v980
    %v982 = vand.u32 %v59, 4294901760
    %v983 = vsub.f32 %v59, %v982
    %984 = vmatpush.msra.mxu0 %v983
    %v985 = vand.u32 %v58, 4294901760
    %v986 = vsub.f32 %v58, %v985
    %987 = vmatpush.msra.mxu0 %v986
    %v988 = vand.u32 %v57, 4294901760
    %v989 = vsub.f32 %v57, %v988
    %990 = vmatpush.msra.mxu0 %v989
    %v991 = vand.u32 %v56, 4294901760
    %v992 = vsub.f32 %v56, %v991
    %993 = vmatpush.msra.mxu0 %v992
    %v994 = vand.u32 %v55, 4294901760
    %v995 = vsub.f32 %v55, %v994
    %996 = vmatpush.msra.mxu0 %v995
    %v997 = vand.u32 %v54, 4294901760
    %v998 = vsub.f32 %v54, %v997
    %999 = vmatpush.msra.mxu0 %v998
    %v1000 = vand.u32 %v17, 4294901760
    %v1001 = vsub.f32 %v17, %v1000
    %1002 = vmatmul.f32.gmra.mxu0 %v1001
    %v1003 = vpop.f32.mrf.mxu0
    %v1004 = vadd.f32 %v950, %v1003
    %1005 = vdwg.mxu0
    %v1006 = vand.u32 %v69, 4294901760
    %1007 = vmatpush.msra.mxu0 %v1006
    %v1008 = vand.u32 %v68, 4294901760
    %1009 = vmatpush.msra.mxu0 %v1008
    %v1010 = vand.u32 %v67, 4294901760
    %1011 = vmatpush.msra.mxu0 %v1010
    %v1012 = vand.u32 %v66, 4294901760
    %1013 = vmatpush.msra.mxu0 %v1012
    %v1014 = vand.u32 %v65, 4294901760
    %1015 = vmatpush.msra.mxu0 %v1014
    %v1016 = vand.u32 %v64, 4294901760
    %1017 = vmatpush.msra.mxu0 %v1016
    %v1018 = vand.u32 %v63, 4294901760
    %1019 = vmatpush.msra.mxu0 %v1018
    %v1020 = vand.u32 %v62, 4294901760
    %1021 = vmatpush.msra.mxu0 %v1020
    %v1022 = vand.u32 %v61, 4294901760
    %1023 = vmatpush.msra.mxu0 %v1022
    %v1024 = vand.u32 %v60, 4294901760
    %1025 = vmatpush.msra.mxu0 %v1024
    %v1026 = vand.u32 %v59, 4294901760
    %1027 = vmatpush.msra.mxu0 %v1026
    %v1028 = vand.u32 %v58, 4294901760
    %1029 = vmatpush.msra.mxu0 %v1028
    %v1030 = vand.u32 %v57, 4294901760
    %1031 = vmatpush.msra.mxu0 %v1030
    %v1032 = vand.u32 %v56, 4294901760
    %1033 = vmatpush.msra.mxu0 %v1032
    %v1034 = vand.u32 %v55, 4294901760
    %1035 = vmatpush.msra.mxu0 %v1034
    %v1036 = vand.u32 %v54, 4294901760
    %1037 = vmatpush.msra.mxu0 %v1036
    %v1038 = vand.u32 %v17, 4294901760
    %v1039 = vsub.f32 %v17, %v1038
    %v1040 = vand.u32 %v1039, 4294901760
    %1041 = vmatmul.f32.gmra.mxu0 %v1040
    %v1042 = vpop.f32.mrf.mxu0
    %v1043 = vadd.f32 %v1004, %v1042
    %1044 = vdwg.mxu0
    %v1045 = vand.u32 %v69, 4294901760
    %v1046 = vsub.f32 %v69, %v1045
    %v1047 = vand.u32 %v1046, 4294901760
    %1048 = vmatpush.msra.mxu0 %v1047
    %v1049 = vand.u32 %v68, 4294901760
    %v1050 = vsub.f32 %v68, %v1049
    %v1051 = vand.u32 %v1050, 4294901760
    %1052 = vmatpush.msra.mxu0 %v1051
    %v1053 = vand.u32 %v67, 4294901760
    %v1054 = vsub.f32 %v67, %v1053
    %v1055 = vand.u32 %v1054, 4294901760
    %1056 = vmatpush.msra.mxu0 %v1055
    %v1057 = vand.u32 %v66, 4294901760
    %v1058 = vsub.f32 %v66, %v1057
    %v1059 = vand.u32 %v1058, 4294901760
    %1060 = vmatpush.msra.mxu0 %v1059
    %v1061 = vand.u32 %v65, 4294901760
    %v1062 = vsub.f32 %v65, %v1061
    %v1063 = vand.u32 %v1062, 4294901760
    %1064 = vmatpush.msra.mxu0 %v1063
    %v1065 = vand.u32 %v64, 4294901760
    %v1066 = vsub.f32 %v64, %v1065
    %v1067 = vand.u32 %v1066, 4294901760
    %1068 = vmatpush.msra.mxu0 %v1067
    %v1069 = vand.u32 %v63, 4294901760
    %v1070 = vsub.f32 %v63, %v1069
    %v1071 = vand.u32 %v1070, 4294901760
    %1072 = vmatpush.msra.mxu0 %v1071
    %v1073 = vand.u32 %v62, 4294901760
    %v1074 = vsub.f32 %v62, %v1073
    %v1075 = vand.u32 %v1074, 4294901760
    %1076 = vmatpush.msra.mxu0 %v1075
    %v1077 = vand.u32 %v61, 4294901760
    %v1078 = vsub.f32 %v61, %v1077
    %v1079 = vand.u32 %v1078, 4294901760
    %1080 = vmatpush.msra.mxu0 %v1079
    %v1081 = vand.u32 %v60, 4294901760
    %v1082 = vsub.f32 %v60, %v1081
    %v1083 = vand.u32 %v1082, 4294901760
    %1084 = vmatpush.msra.mxu0 %v1083
    %v1085 = vand.u32 %v59, 4294901760
    %v1086 = vsub.f32 %v59, %v1085
    %v1087 = vand.u32 %v1086, 4294901760
    %1088 = vmatpush.msra.mxu0 %v1087
    %v1089 = vand.u32 %v58, 4294901760
    %v1090 = vsub.f32 %v58, %v1089
    %v1091 = vand.u32 %v1090, 4294901760
    %1092 = vmatpush.msra.mxu0 %v1091
    %v1093 = vand.u32 %v57, 4294901760
    %v1094 = vsub.f32 %v57, %v1093
    %v1095 = vand.u32 %v1094, 4294901760
    %1096 = vmatpush.msra.mxu0 %v1095
    %v1097 = vand.u32 %v56, 4294901760
    %v1098 = vsub.f32 %v56, %v1097
    %v1099 = vand.u32 %v1098, 4294901760
    %1100 = vmatpush.msra.mxu0 %v1099
    %v1101 = vand.u32 %v55, 4294901760
    %v1102 = vsub.f32 %v55, %v1101
    %v1103 = vand.u32 %v1102, 4294901760
    %1104 = vmatpush.msra.mxu0 %v1103
    %v1105 = vand.u32 %v54, 4294901760
    %v1106 = vsub.f32 %v54, %v1105
    %v1107 = vand.u32 %v1106, 4294901760
    %1108 = vmatpush.msra.mxu0 %v1107
    %v1109 = vand.u32 %v17, 4294901760
    %1110 = vmatmul.f32.gmra.mxu0 %v1109
    %v1111 = vpop.f32.mrf.mxu0
    %v1112 = vadd.f32 %v1043, %v1111
    %1113 = vdwg.mxu0
    %v1114 = vand.u32 %v69, 4294901760
    %1115 = vmatpush.msra.mxu0 %v1114
    %v1116 = vand.u32 %v68, 4294901760
    %1117 = vmatpush.msra.mxu0 %v1116
    %v1118 = vand.u32 %v67, 4294901760
    %1119 = vmatpush.msra.mxu0 %v1118
    %v1120 = vand.u32 %v66, 4294901760
    %1121 = vmatpush.msra.mxu0 %v1120
    %v1122 = vand.u32 %v65, 4294901760
    %1123 = vmatpush.msra.mxu0 %v1122
    %v1124 = vand.u32 %v64, 4294901760
    %1125 = vmatpush.msra.mxu0 %v1124
    %v1126 = vand.u32 %v63, 4294901760
    %1127 = vmatpush.msra.mxu0 %v1126
    %v1128 = vand.u32 %v62, 4294901760
    %1129 = vmatpush.msra.mxu0 %v1128
    %v1130 = vand.u32 %v61, 4294901760
    %1131 = vmatpush.msra.mxu0 %v1130
    %v1132 = vand.u32 %v60, 4294901760
    %1133 = vmatpush.msra.mxu0 %v1132
    %v1134 = vand.u32 %v59, 4294901760
    %1135 = vmatpush.msra.mxu0 %v1134
    %v1136 = vand.u32 %v58, 4294901760
    %1137 = vmatpush.msra.mxu0 %v1136
    %v1138 = vand.u32 %v57, 4294901760
    %1139 = vmatpush.msra.mxu0 %v1138
    %v1140 = vand.u32 %v56, 4294901760
    %1141 = vmatpush.msra.mxu0 %v1140
    %v1142 = vand.u32 %v55, 4294901760
    %1143 = vmatpush.msra.mxu0 %v1142
    %v1144 = vand.u32 %v54, 4294901760
    %1145 = vmatpush.msra.mxu0 %v1144
    %v1146 = vand.u32 %v17, 4294901760
    %1147 = vmatmul.f32.gmra.mxu0 %v1146
    %v1148 = vpop.f32.mrf.mxu0
    %v1149 = vadd.f32 %v1112, %v1148
    %1150 = vdwg.mxu0
    %v1151 = vand.u32 %v85, 4294901760
    %1152 = vmatpush.msra.mxu0 %v1151
    %v1153 = vand.u32 %v84, 4294901760
    %1154 = vmatpush.msra.mxu0 %v1153
    %v1155 = vand.u32 %v83, 4294901760
    %1156 = vmatpush.msra.mxu0 %v1155
    %v1157 = vand.u32 %v82, 4294901760
    %1158 = vmatpush.msra.mxu0 %v1157
    %v1159 = vand.u32 %v81, 4294901760
    %1160 = vmatpush.msra.mxu0 %v1159
    %v1161 = vand.u32 %v80, 4294901760
    %1162 = vmatpush.msra.mxu0 %v1161
    %v1163 = vand.u32 %v79, 4294901760
    %1164 = vmatpush.msra.mxu0 %v1163
    %v1165 = vand.u32 %v78, 4294901760
    %1166 = vmatpush.msra.mxu0 %v1165
    %v1167 = vand.u32 %v77, 4294901760
    %1168 = vmatpush.msra.mxu0 %v1167
    %v1169 = vand.u32 %v76, 4294901760
    %1170 = vmatpush.msra.mxu0 %v1169
    %v1171 = vand.u32 %v75, 4294901760
    %1172 = vmatpush.msra.mxu0 %v1171
    %v1173 = vand.u32 %v74, 4294901760
    %1174 = vmatpush.msra.mxu0 %v1173
    %v1175 = vand.u32 %v73, 4294901760
    %1176 = vmatpush.msra.mxu0 %v1175
    %v1177 = vand.u32 %v72, 4294901760
    %1178 = vmatpush.msra.mxu0 %v1177
    %v1179 = vand.u32 %v71, 4294901760
    %1180 = vmatpush.msra.mxu0 %v1179
    %v1181 = vand.u32 %v70, 4294901760
    %1182 = vmatpush.msra.mxu0 %v1181
    %v1183 = vand.u32 %v18, 4294901760
    %v1184 = vsub.f32 %v18, %v1183
    %v1185 = vand.u32 %v1184, 4294901760
    %v1186 = vsub.f32 %v1184, %v1185
    %v1187 = vand.u32 %v1186, 4294901760
    %1188 = vmatmul.f32.gmra.mxu0 %v1187
    %v1189 = vpop.f32.mrf.mxu0
    %v1190 = vadd.f32 %v1149, %v1189
    %1191 = vdwg.mxu0
    %v1192 = vand.u32 %v85, 4294901760
    %v1193 = vsub.f32 %v85, %v1192
    %v1194 = vand.u32 %v1193, 4294901760
    %v1195 = vsub.f32 %v1193, %v1194
    %v1196 = vand.u32 %v1195, 4294901760
    %1197 = vmatpush.msra.mxu0 %v1196
    %v1198 = vand.u32 %v84, 4294901760
    %v1199 = vsub.f32 %v84, %v1198
    %v1200 = vand.u32 %v1199, 4294901760
    %v1201 = vsub.f32 %v1199, %v1200
    %v1202 = vand.u32 %v1201, 4294901760
    %1203 = vmatpush.msra.mxu0 %v1202
    %v1204 = vand.u32 %v83, 4294901760
    %v1205 = vsub.f32 %v83, %v1204
    %v1206 = vand.u32 %v1205, 4294901760
    %v1207 = vsub.f32 %v1205, %v1206
    %v1208 = vand.u32 %v1207, 4294901760
    %1209 = vmatpush.msra.mxu0 %v1208
    %v1210 = vand.u32 %v82, 4294901760
    %v1211 = vsub.f32 %v82, %v1210
    %v1212 = vand.u32 %v1211, 4294901760
    %v1213 = vsub.f32 %v1211, %v1212
    %v1214 = vand.u32 %v1213, 4294901760
    %1215 = vmatpush.msra.mxu0 %v1214
    %v1216 = vand.u32 %v81, 4294901760
    %v1217 = vsub.f32 %v81, %v1216
    %v1218 = vand.u32 %v1217, 4294901760
    %v1219 = vsub.f32 %v1217, %v1218
    %v1220 = vand.u32 %v1219, 4294901760
    %1221 = vmatpush.msra.mxu0 %v1220
    %v1222 = vand.u32 %v80, 4294901760
    %v1223 = vsub.f32 %v80, %v1222
    %v1224 = vand.u32 %v1223, 4294901760
    %v1225 = vsub.f32 %v1223, %v1224
    %v1226 = vand.u32 %v1225, 4294901760
    %1227 = vmatpush.msra.mxu0 %v1226
    %v1228 = vand.u32 %v79, 4294901760
    %v1229 = vsub.f32 %v79, %v1228
    %v1230 = vand.u32 %v1229, 4294901760
    %v1231 = vsub.f32 %v1229, %v1230
    %v1232 = vand.u32 %v1231, 4294901760
    %1233 = vmatpush.msra.mxu0 %v1232
    %v1234 = vand.u32 %v78, 4294901760
    %v1235 = vsub.f32 %v78, %v1234
    %v1236 = vand.u32 %v1235, 4294901760
    %v1237 = vsub.f32 %v1235, %v1236
    %v1238 = vand.u32 %v1237, 4294901760
    %1239 = vmatpush.msra.mxu0 %v1238
    %v1240 = vand.u32 %v77, 4294901760
    %v1241 = vsub.f32 %v77, %v1240
    %v1242 = vand.u32 %v1241, 4294901760
    %v1243 = vsub.f32 %v1241, %v1242
    %v1244 = vand.u32 %v1243, 4294901760
    %1245 = vmatpush.msra.mxu0 %v1244
    %v1246 = vand.u32 %v76, 4294901760
    %v1247 = vsub.f32 %v76, %v1246
    %v1248 = vand.u32 %v1247, 4294901760
    %v1249 = vsub.f32 %v1247, %v1248
    %v1250 = vand.u32 %v1249, 4294901760
    %1251 = vmatpush.msra.mxu0 %v1250
    %v1252 = vand.u32 %v75, 4294901760
    %v1253 = vsub.f32 %v75, %v1252
    %v1254 = vand.u32 %v1253, 4294901760
    %v1255 = vsub.f32 %v1253, %v1254
    %v1256 = vand.u32 %v1255, 4294901760
    %1257 = vmatpush.msra.mxu0 %v1256
    %v1258 = vand.u32 %v74, 4294901760
    %v1259 = vsub.f32 %v74, %v1258
    %v1260 = vand.u32 %v1259, 4294901760
    %v1261 = vsub.f32 %v1259, %v1260
    %v1262 = vand.u32 %v1261, 4294901760
    %1263 = vmatpush.msra.mxu0 %v1262
    %v1264 = vand.u32 %v73, 4294901760
    %v1265 = vsub.f32 %v73, %v1264
    %v1266 = vand.u32 %v1265, 4294901760
    %v1267 = vsub.f32 %v1265, %v1266
    %v1268 = vand.u32 %v1267, 4294901760
    %1269 = vmatpush.msra.mxu0 %v1268
    %v1270 = vand.u32 %v72, 4294901760
    %v1271 = vsub.f32 %v72, %v1270
    %v1272 = vand.u32 %v1271, 4294901760
    %v1273 = vsub.f32 %v1271, %v1272
    %v1274 = vand.u32 %v1273, 4294901760
    %1275 = vmatpush.msra.mxu0 %v1274
    %v1276 = vand.u32 %v71, 4294901760
    %v1277 = vsub.f32 %v71, %v1276
    %v1278 = vand.u32 %v1277, 4294901760
    %v1279 = vsub.f32 %v1277, %v1278
    %v1280 = vand.u32 %v1279, 4294901760
    %1281 = vmatpush.msra.mxu0 %v1280
    %v1282 = vand.u32 %v70, 4294901760
    %v1283 = vsub.f32 %v70, %v1282
    %v1284 = vand.u32 %v1283, 4294901760
    %v1285 = vsub.f32 %v1283, %v1284
    %v1286 = vand.u32 %v1285, 4294901760
    %1287 = vmatpush.msra.mxu0 %v1286
    %v1288 = vand.u32 %v18, 4294901760
    %1289 = vmatmul.f32.gmra.mxu0 %v1288
    %v1290 = vpop.f32.mrf.mxu0
    %v1291 = vadd.f32 %v1190, %v1290
    %1292 = vdwg.mxu0
    %v1293 = vand.u32 %v85, 4294901760
    %v1294 = vsub.f32 %v85, %v1293
    %1295 = vmatpush.msra.mxu0 %v1294
    %v1296 = vand.u32 %v84, 4294901760
    %v1297 = vsub.f32 %v84, %v1296
    %1298 = vmatpush.msra.mxu0 %v1297
    %v1299 = vand.u32 %v83, 4294901760
    %v1300 = vsub.f32 %v83, %v1299
    %1301 = vmatpush.msra.mxu0 %v1300
    %v1302 = vand.u32 %v82, 4294901760
    %v1303 = vsub.f32 %v82, %v1302
    %1304 = vmatpush.msra.mxu0 %v1303
    %v1305 = vand.u32 %v81, 4294901760
    %v1306 = vsub.f32 %v81, %v1305
    %1307 = vmatpush.msra.mxu0 %v1306
    %v1308 = vand.u32 %v80, 4294901760
    %v1309 = vsub.f32 %v80, %v1308
    %1310 = vmatpush.msra.mxu0 %v1309
    %v1311 = vand.u32 %v79, 4294901760
    %v1312 = vsub.f32 %v79, %v1311
    %1313 = vmatpush.msra.mxu0 %v1312
    %v1314 = vand.u32 %v78, 4294901760
    %v1315 = vsub.f32 %v78, %v1314
    %1316 = vmatpush.msra.mxu0 %v1315
    %v1317 = vand.u32 %v77, 4294901760
    %v1318 = vsub.f32 %v77, %v1317
    %1319 = vmatpush.msra.mxu0 %v1318
    %v1320 = vand.u32 %v76, 4294901760
    %v1321 = vsub.f32 %v76, %v1320
    %1322 = vmatpush.msra.mxu0 %v1321
    %v1323 = vand.u32 %v75, 4294901760
    %v1324 = vsub.f32 %v75, %v1323
    %1325 = vmatpush.msra.mxu0 %v1324
    %v1326 = vand.u32 %v74, 4294901760
    %v1327 = vsub.f32 %v74, %v1326
    %1328 = vmatpush.msra.mxu0 %v1327
    %v1329 = vand.u32 %v73, 4294901760
    %v1330 = vsub.f32 %v73, %v1329
    %1331 = vmatpush.msra.mxu0 %v1330
    %v1332 = vand.u32 %v72, 4294901760
    %v1333 = vsub.f32 %v72, %v1332
    %1334 = vmatpush.msra.mxu0 %v1333
    %v1335 = vand.u32 %v71, 4294901760
    %v1336 = vsub.f32 %v71, %v1335
    %1337 = vmatpush.msra.mxu0 %v1336
    %v1338 = vand.u32 %v70, 4294901760
    %v1339 = vsub.f32 %v70, %v1338
    %1340 = vmatpush.msra.mxu0 %v1339
    %v1341 = vand.u32 %v18, 4294901760
    %v1342 = vsub.f32 %v18, %v1341
    %1343 = vmatmul.f32.gmra.mxu0 %v1342
    %v1344 = vpop.f32.mrf.mxu0
    %v1345 = vadd.f32 %v1291, %v1344
    %1346 = vdwg.mxu0
    %v1347 = vand.u32 %v85, 4294901760
    %1348 = vmatpush.msra.mxu0 %v1347
    %v1349 = vand.u32 %v84, 4294901760
    %1350 = vmatpush.msra.mxu0 %v1349
    %v1351 = vand.u32 %v83, 4294901760
    %1352 = vmatpush.msra.mxu0 %v1351
    %v1353 = vand.u32 %v82, 4294901760
    %1354 = vmatpush.msra.mxu0 %v1353
    %v1355 = vand.u32 %v81, 4294901760
    %1356 = vmatpush.msra.mxu0 %v1355
    %v1357 = vand.u32 %v80, 4294901760
    %1358 = vmatpush.msra.mxu0 %v1357
    %v1359 = vand.u32 %v79, 4294901760
    %1360 = vmatpush.msra.mxu0 %v1359
    %v1361 = vand.u32 %v78, 4294901760
    %1362 = vmatpush.msra.mxu0 %v1361
    %v1363 = vand.u32 %v77, 4294901760
    %1364 = vmatpush.msra.mxu0 %v1363
    %v1365 = vand.u32 %v76, 4294901760
    %1366 = vmatpush.msra.mxu0 %v1365
    %v1367 = vand.u32 %v75, 4294901760
    %1368 = vmatpush.msra.mxu0 %v1367
    %v1369 = vand.u32 %v74, 4294901760
    %1370 = vmatpush.msra.mxu0 %v1369
    %v1371 = vand.u32 %v73, 4294901760
    %1372 = vmatpush.msra.mxu0 %v1371
    %v1373 = vand.u32 %v72, 4294901760
    %1374 = vmatpush.msra.mxu0 %v1373
    %v1375 = vand.u32 %v71, 4294901760
    %1376 = vmatpush.msra.mxu0 %v1375
    %v1377 = vand.u32 %v70, 4294901760
    %1378 = vmatpush.msra.mxu0 %v1377
    %v1379 = vand.u32 %v18, 4294901760
    %v1380 = vsub.f32 %v18, %v1379
    %v1381 = vand.u32 %v1380, 4294901760
    %1382 = vmatmul.f32.gmra.mxu0 %v1381
    %v1383 = vpop.f32.mrf.mxu0
    %v1384 = vadd.f32 %v1345, %v1383
    %1385 = vdwg.mxu0
    %v1386 = vand.u32 %v85, 4294901760
    %v1387 = vsub.f32 %v85, %v1386
    %v1388 = vand.u32 %v1387, 4294901760
    %1389 = vmatpush.msra.mxu0 %v1388
    %v1390 = vand.u32 %v84, 4294901760
    %v1391 = vsub.f32 %v84, %v1390
    %v1392 = vand.u32 %v1391, 4294901760
    %1393 = vmatpush.msra.mxu0 %v1392
    %v1394 = vand.u32 %v83, 4294901760
    %v1395 = vsub.f32 %v83, %v1394
    %v1396 = vand.u32 %v1395, 4294901760
    %1397 = vmatpush.msra.mxu0 %v1396
    %v1398 = vand.u32 %v82, 4294901760
    %v1399 = vsub.f32 %v82, %v1398
    %v1400 = vand.u32 %v1399, 4294901760
    %1401 = vmatpush.msra.mxu0 %v1400
    %v1402 = vand.u32 %v81, 4294901760
    %v1403 = vsub.f32 %v81, %v1402
    %v1404 = vand.u32 %v1403, 4294901760
    %1405 = vmatpush.msra.mxu0 %v1404
    %v1406 = vand.u32 %v80, 4294901760
    %v1407 = vsub.f32 %v80, %v1406
    %v1408 = vand.u32 %v1407, 4294901760
    %1409 = vmatpush.msra.mxu0 %v1408
    %v1410 = vand.u32 %v79, 4294901760
    %v1411 = vsub.f32 %v79, %v1410
    %v1412 = vand.u32 %v1411, 4294901760
    %1413 = vmatpush.msra.mxu0 %v1412
    %v1414 = vand.u32 %v78, 4294901760
    %v1415 = vsub.f32 %v78, %v1414
    %v1416 = vand.u32 %v1415, 4294901760
    %1417 = vmatpush.msra.mxu0 %v1416
    %v1418 = vand.u32 %v77, 4294901760
    %v1419 = vsub.f32 %v77, %v1418
    %v1420 = vand.u32 %v1419, 4294901760
    %1421 = vmatpush.msra.mxu0 %v1420
    %v1422 = vand.u32 %v76, 4294901760
    %v1423 = vsub.f32 %v76, %v1422
    %v1424 = vand.u32 %v1423, 4294901760
    %1425 = vmatpush.msra.mxu0 %v1424
    %v1426 = vand.u32 %v75, 4294901760
    %v1427 = vsub.f32 %v75, %v1426
    %v1428 = vand.u32 %v1427, 4294901760
    %1429 = vmatpush.msra.mxu0 %v1428
    %v1430 = vand.u32 %v74, 4294901760
    %v1431 = vsub.f32 %v74, %v1430
    %v1432 = vand.u32 %v1431, 4294901760
    %1433 = vmatpush.msra.mxu0 %v1432
    %v1434 = vand.u32 %v73, 4294901760
    %v1435 = vsub.f32 %v73, %v1434
    %v1436 = vand.u32 %v1435, 4294901760
    %1437 = vmatpush.msra.mxu0 %v1436
    %v1438 = vand.u32 %v72, 4294901760
    %v1439 = vsub.f32 %v72, %v1438
    %v1440 = vand.u32 %v1439, 4294901760
    %1441 = vmatpush.msra.mxu0 %v1440
    %v1442 = vand.u32 %v71, 4294901760
    %v1443 = vsub.f32 %v71, %v1442
    %v1444 = vand.u32 %v1443, 4294901760
    %1445 = vmatpush.msra.mxu0 %v1444
    %v1446 = vand.u32 %v70, 4294901760
    %v1447 = vsub.f32 %v70, %v1446
    %v1448 = vand.u32 %v1447, 4294901760
    %1449 = vmatpush.msra.mxu0 %v1448
    %v1450 = vand.u32 %v18, 4294901760
    %1451 = vmatmul.f32.gmra.mxu0 %v1450
    %v1452 = vpop.f32.mrf.mxu0
    %v1453 = vadd.f32 %v1384, %v1452
    %1454 = vdwg.mxu0
    %v1455 = vand.u32 %v85, 4294901760
    %1456 = vmatpush.msra.mxu0 %v1455
    %v1457 = vand.u32 %v84, 4294901760
    %1458 = vmatpush.msra.mxu0 %v1457
    %v1459 = vand.u32 %v83, 4294901760
    %1460 = vmatpush.msra.mxu0 %v1459
    %v1461 = vand.u32 %v82, 4294901760
    %1462 = vmatpush.msra.mxu0 %v1461
    %v1463 = vand.u32 %v81, 4294901760
    %1464 = vmatpush.msra.mxu0 %v1463
    %v1465 = vand.u32 %v80, 4294901760
    %1466 = vmatpush.msra.mxu0 %v1465
    %v1467 = vand.u32 %v79, 4294901760
    %1468 = vmatpush.msra.mxu0 %v1467
    %v1469 = vand.u32 %v78, 4294901760
    %1470 = vmatpush.msra.mxu0 %v1469
    %v1471 = vand.u32 %v77, 4294901760
    %1472 = vmatpush.msra.mxu0 %v1471
    %v1473 = vand.u32 %v76, 4294901760
    %1474 = vmatpush.msra.mxu0 %v1473
    %v1475 = vand.u32 %v75, 4294901760
    %1476 = vmatpush.msra.mxu0 %v1475
    %v1477 = vand.u32 %v74, 4294901760
    %1478 = vmatpush.msra.mxu0 %v1477
    %v1479 = vand.u32 %v73, 4294901760
    %1480 = vmatpush.msra.mxu0 %v1479
    %v1481 = vand.u32 %v72, 4294901760
    %1482 = vmatpush.msra.mxu0 %v1481
    %v1483 = vand.u32 %v71, 4294901760
    %1484 = vmatpush.msra.mxu0 %v1483
    %v1485 = vand.u32 %v70, 4294901760
    %1486 = vmatpush.msra.mxu0 %v1485
    %v1487 = vand.u32 %v18, 4294901760
    %1488 = vmatmul.f32.gmra.mxu0 %v1487
    %v1489 = vpop.f32.mrf.mxu0
    %v1490 = vadd.f32 %v1453, %v1489
    %1491 = vdwg.mxu0
    %v1492 = vand.u32 %v101, 4294901760
    %1493 = vmatpush.msra.mxu0 %v1492
    %v1494 = vand.u32 %v100, 4294901760
    %1495 = vmatpush.msra.mxu0 %v1494
    %v1496 = vand.u32 %v99, 4294901760
    %1497 = vmatpush.msra.mxu0 %v1496
    %v1498 = vand.u32 %v98, 4294901760
    %1499 = vmatpush.msra.mxu0 %v1498
    %v1500 = vand.u32 %v97, 4294901760
    %1501 = vmatpush.msra.mxu0 %v1500
    %v1502 = vand.u32 %v96, 4294901760
    %1503 = vmatpush.msra.mxu0 %v1502
    %v1504 = vand.u32 %v95, 4294901760
    %1505 = vmatpush.msra.mxu0 %v1504
    %v1506 = vand.u32 %v94, 4294901760
    %1507 = vmatpush.msra.mxu0 %v1506
    %v1508 = vand.u32 %v93, 4294901760
    %1509 = vmatpush.msra.mxu0 %v1508
    %v1510 = vand.u32 %v92, 4294901760
    %1511 = vmatpush.msra.mxu0 %v1510
    %v1512 = vand.u32 %v91, 4294901760
    %1513 = vmatpush.msra.mxu0 %v1512
    %v1514 = vand.u32 %v90, 4294901760
    %1515 = vmatpush.msra.mxu0 %v1514
    %v1516 = vand.u32 %v89, 4294901760
    %1517 = vmatpush.msra.mxu0 %v1516
    %v1518 = vand.u32 %v88, 4294901760
    %1519 = vmatpush.msra.mxu0 %v1518
    %v1520 = vand.u32 %v87, 4294901760
    %1521 = vmatpush.msra.mxu0 %v1520
    %v1522 = vand.u32 %v86, 4294901760
    %1523 = vmatpush.msra.mxu0 %v1522
    %v1524 = vand.u32 %v19, 4294901760
    %v1525 = vsub.f32 %v19, %v1524
    %v1526 = vand.u32 %v1525, 4294901760
    %v1527 = vsub.f32 %v1525, %v1526
    %v1528 = vand.u32 %v1527, 4294901760
    %1529 = vmatmul.f32.gmra.mxu0 %v1528
    %v1530 = vpop.f32.mrf.mxu0
    %v1531 = vadd.f32 %v1490, %v1530
    %1532 = vdwg.mxu0
    %v1533 = vand.u32 %v101, 4294901760
    %v1534 = vsub.f32 %v101, %v1533
    %v1535 = vand.u32 %v1534, 4294901760
    %v1536 = vsub.f32 %v1534, %v1535
    %v1537 = vand.u32 %v1536, 4294901760
    %1538 = vmatpush.msra.mxu0 %v1537
    %v1539 = vand.u32 %v100, 4294901760
    %v1540 = vsub.f32 %v100, %v1539
    %v1541 = vand.u32 %v1540, 4294901760
    %v1542 = vsub.f32 %v1540, %v1541
    %v1543 = vand.u32 %v1542, 4294901760
    %1544 = vmatpush.msra.mxu0 %v1543
    %v1545 = vand.u32 %v99, 4294901760
    %v1546 = vsub.f32 %v99, %v1545
    %v1547 = vand.u32 %v1546, 4294901760
    %v1548 = vsub.f32 %v1546, %v1547
    %v1549 = vand.u32 %v1548, 4294901760
    %1550 = vmatpush.msra.mxu0 %v1549
    %v1551 = vand.u32 %v98, 4294901760
    %v1552 = vsub.f32 %v98, %v1551
    %v1553 = vand.u32 %v1552, 4294901760
    %v1554 = vsub.f32 %v1552, %v1553
    %v1555 = vand.u32 %v1554, 4294901760
    %1556 = vmatpush.msra.mxu0 %v1555
    %v1557 = vand.u32 %v97, 4294901760
    %v1558 = vsub.f32 %v97, %v1557
    %v1559 = vand.u32 %v1558, 4294901760
    %v1560 = vsub.f32 %v1558, %v1559
    %v1561 = vand.u32 %v1560, 4294901760
    %1562 = vmatpush.msra.mxu0 %v1561
    %v1563 = vand.u32 %v96, 4294901760
    %v1564 = vsub.f32 %v96, %v1563
    %v1565 = vand.u32 %v1564, 4294901760
    %v1566 = vsub.f32 %v1564, %v1565
    %v1567 = vand.u32 %v1566, 4294901760
    %1568 = vmatpush.msra.mxu0 %v1567
    %v1569 = vand.u32 %v95, 4294901760
    %v1570 = vsub.f32 %v95, %v1569
    %v1571 = vand.u32 %v1570, 4294901760
    %v1572 = vsub.f32 %v1570, %v1571
    %v1573 = vand.u32 %v1572, 4294901760
    %1574 = vmatpush.msra.mxu0 %v1573
    %v1575 = vand.u32 %v94, 4294901760
    %v1576 = vsub.f32 %v94, %v1575
    %v1577 = vand.u32 %v1576, 4294901760
    %v1578 = vsub.f32 %v1576, %v1577
    %v1579 = vand.u32 %v1578, 4294901760
    %1580 = vmatpush.msra.mxu0 %v1579
    %v1581 = vand.u32 %v93, 4294901760
    %v1582 = vsub.f32 %v93, %v1581
    %v1583 = vand.u32 %v1582, 4294901760
    %v1584 = vsub.f32 %v1582, %v1583
    %v1585 = vand.u32 %v1584, 4294901760
    %1586 = vmatpush.msra.mxu0 %v1585
    %v1587 = vand.u32 %v92, 4294901760
    %v1588 = vsub.f32 %v92, %v1587
    %v1589 = vand.u32 %v1588, 4294901760
    %v1590 = vsub.f32 %v1588, %v1589
    %v1591 = vand.u32 %v1590, 4294901760
    %1592 = vmatpush.msra.mxu0 %v1591
    %v1593 = vand.u32 %v91, 4294901760
    %v1594 = vsub.f32 %v91, %v1593
    %v1595 = vand.u32 %v1594, 4294901760
    %v1596 = vsub.f32 %v1594, %v1595
    %v1597 = vand.u32 %v1596, 4294901760
    %1598 = vmatpush.msra.mxu0 %v1597
    %v1599 = vand.u32 %v90, 4294901760
    %v1600 = vsub.f32 %v90, %v1599
    %v1601 = vand.u32 %v1600, 4294901760
    %v1602 = vsub.f32 %v1600, %v1601
    %v1603 = vand.u32 %v1602, 4294901760
    %1604 = vmatpush.msra.mxu0 %v1603
    %v1605 = vand.u32 %v89, 4294901760
    %v1606 = vsub.f32 %v89, %v1605
    %v1607 = vand.u32 %v1606, 4294901760
    %v1608 = vsub.f32 %v1606, %v1607
    %v1609 = vand.u32 %v1608, 4294901760
    %1610 = vmatpush.msra.mxu0 %v1609
    %v1611 = vand.u32 %v88, 4294901760
    %v1612 = vsub.f32 %v88, %v1611
    %v1613 = vand.u32 %v1612, 4294901760
    %v1614 = vsub.f32 %v1612, %v1613
    %v1615 = vand.u32 %v1614, 4294901760
    %1616 = vmatpush.msra.mxu0 %v1615
    %v1617 = vand.u32 %v87, 4294901760
    %v1618 = vsub.f32 %v87, %v1617
    %v1619 = vand.u32 %v1618, 4294901760
    %v1620 = vsub.f32 %v1618, %v1619
    %v1621 = vand.u32 %v1620, 4294901760
    %1622 = vmatpush.msra.mxu0 %v1621
    %v1623 = vand.u32 %v86, 4294901760
    %v1624 = vsub.f32 %v86, %v1623
    %v1625 = vand.u32 %v1624, 4294901760
    %v1626 = vsub.f32 %v1624, %v1625
    %v1627 = vand.u32 %v1626, 4294901760
    %1628 = vmatpush.msra.mxu0 %v1627
    %v1629 = vand.u32 %v19, 4294901760
    %1630 = vmatmul.f32.gmra.mxu0 %v1629
    %v1631 = vpop.f32.mrf.mxu0
    %v1632 = vadd.f32 %v1531, %v1631
    %1633 = vdwg.mxu0
    %v1634 = vand.u32 %v101, 4294901760
    %v1635 = vsub.f32 %v101, %v1634
    %1636 = vmatpush.msra.mxu0 %v1635
    %v1637 = vand.u32 %v100, 4294901760
    %v1638 = vsub.f32 %v100, %v1637
    %1639 = vmatpush.msra.mxu0 %v1638
    %v1640 = vand.u32 %v99, 4294901760
    %v1641 = vsub.f32 %v99, %v1640
    %1642 = vmatpush.msra.mxu0 %v1641
    %v1643 = vand.u32 %v98, 4294901760
    %v1644 = vsub.f32 %v98, %v1643
    %1645 = vmatpush.msra.mxu0 %v1644
    %v1646 = vand.u32 %v97, 4294901760
    %v1647 = vsub.f32 %v97, %v1646
    %1648 = vmatpush.msra.mxu0 %v1647
    %v1649 = vand.u32 %v96, 4294901760
    %v1650 = vsub.f32 %v96, %v1649
    %1651 = vmatpush.msra.mxu0 %v1650
    %v1652 = vand.u32 %v95, 4294901760
    %v1653 = vsub.f32 %v95, %v1652
    %1654 = vmatpush.msra.mxu0 %v1653
    %v1655 = vand.u32 %v94, 4294901760
    %v1656 = vsub.f32 %v94, %v1655
    %1657 = vmatpush.msra.mxu0 %v1656
    %v1658 = vand.u32 %v93, 4294901760
    %v1659 = vsub.f32 %v93, %v1658
    %1660 = vmatpush.msra.mxu0 %v1659
    %v1661 = vand.u32 %v92, 4294901760
    %v1662 = vsub.f32 %v92, %v1661
    %1663 = vmatpush.msra.mxu0 %v1662
    %v1664 = vand.u32 %v91, 4294901760
    %v1665 = vsub.f32 %v91, %v1664
    %1666 = vmatpush.msra.mxu0 %v1665
    %v1667 = vand.u32 %v90, 4294901760
    %v1668 = vsub.f32 %v90, %v1667
    %1669 = vmatpush.msra.mxu0 %v1668
    %v1670 = vand.u32 %v89, 4294901760
    %v1671 = vsub.f32 %v89, %v1670
    %1672 = vmatpush.msra.mxu0 %v1671
    %v1673 = vand.u32 %v88, 4294901760
    %v1674 = vsub.f32 %v88, %v1673
    %1675 = vmatpush.msra.mxu0 %v1674
    %v1676 = vand.u32 %v87, 4294901760
    %v1677 = vsub.f32 %v87, %v1676
    %1678 = vmatpush.msra.mxu0 %v1677
    %v1679 = vand.u32 %v86, 4294901760
    %v1680 = vsub.f32 %v86, %v1679
    %1681 = vmatpush.msra.mxu0 %v1680
    %v1682 = vand.u32 %v19, 4294901760
    %v1683 = vsub.f32 %v19, %v1682
    %1684 = vmatmul.f32.gmra.mxu0 %v1683
    %v1685 = vpop.f32.mrf.mxu0
    %v1686 = vadd.f32 %v1632, %v1685
    %1687 = vdwg.mxu0
    %v1688 = vand.u32 %v101, 4294901760
    %1689 = vmatpush.msra.mxu0 %v1688
    %v1690 = vand.u32 %v100, 4294901760
    %1691 = vmatpush.msra.mxu0 %v1690
    %v1692 = vand.u32 %v99, 4294901760
    %1693 = vmatpush.msra.mxu0 %v1692
    %v1694 = vand.u32 %v98, 4294901760
    %1695 = vmatpush.msra.mxu0 %v1694
    %v1696 = vand.u32 %v97, 4294901760
    %1697 = vmatpush.msra.mxu0 %v1696
    %v1698 = vand.u32 %v96, 4294901760
    %1699 = vmatpush.msra.mxu0 %v1698
    %v1700 = vand.u32 %v95, 4294901760
    %1701 = vmatpush.msra.mxu0 %v1700
    %v1702 = vand.u32 %v94, 4294901760
    %1703 = vmatpush.msra.mxu0 %v1702
    %v1704 = vand.u32 %v93, 4294901760
    %1705 = vmatpush.msra.mxu0 %v1704
    %v1706 = vand.u32 %v92, 4294901760
    %1707 = vmatpush.msra.mxu0 %v1706
    %v1708 = vand.u32 %v91, 4294901760
    %1709 = vmatpush.msra.mxu0 %v1708
    %v1710 = vand.u32 %v90, 4294901760
    %1711 = vmatpush.msra.mxu0 %v1710
    %v1712 = vand.u32 %v89, 4294901760
    %1713 = vmatpush.msra.mxu0 %v1712
    %v1714 = vand.u32 %v88, 4294901760
    %1715 = vmatpush.msra.mxu0 %v1714
    %v1716 = vand.u32 %v87, 4294901760
    %1717 = vmatpush.msra.mxu0 %v1716
    %v1718 = vand.u32 %v86, 4294901760
    %1719 = vmatpush.msra.mxu0 %v1718
    %v1720 = vand.u32 %v19, 4294901760
    %v1721 = vsub.f32 %v19, %v1720
    %v1722 = vand.u32 %v1721, 4294901760
    %1723 = vmatmul.f32.gmra.mxu0 %v1722
    %v1724 = vpop.f32.mrf.mxu0
    %v1725 = vadd.f32 %v1686, %v1724
    %1726 = vdwg.mxu0
    %v1727 = vand.u32 %v101, 4294901760
    %v1728 = vsub.f32 %v101, %v1727
    %v1729 = vand.u32 %v1728, 4294901760
    %1730 = vmatpush.msra.mxu0 %v1729
    %v1731 = vand.u32 %v100, 4294901760
    %v1732 = vsub.f32 %v100, %v1731
    %v1733 = vand.u32 %v1732, 4294901760
    %1734 = vmatpush.msra.mxu0 %v1733
    %v1735 = vand.u32 %v99, 4294901760
    %v1736 = vsub.f32 %v99, %v1735
    %v1737 = vand.u32 %v1736, 4294901760
    %1738 = vmatpush.msra.mxu0 %v1737
    %v1739 = vand.u32 %v98, 4294901760
    %v1740 = vsub.f32 %v98, %v1739
    %v1741 = vand.u32 %v1740, 4294901760
    %1742 = vmatpush.msra.mxu0 %v1741
    %v1743 = vand.u32 %v97, 4294901760
    %v1744 = vsub.f32 %v97, %v1743
    %v1745 = vand.u32 %v1744, 4294901760
    %1746 = vmatpush.msra.mxu0 %v1745
    %v1747 = vand.u32 %v96, 4294901760
    %v1748 = vsub.f32 %v96, %v1747
    %v1749 = vand.u32 %v1748, 4294901760
    %1750 = vmatpush.msra.mxu0 %v1749
    %v1751 = vand.u32 %v95, 4294901760
    %v1752 = vsub.f32 %v95, %v1751
    %v1753 = vand.u32 %v1752, 4294901760
    %1754 = vmatpush.msra.mxu0 %v1753
    %v1755 = vand.u32 %v94, 4294901760
    %v1756 = vsub.f32 %v94, %v1755
    %v1757 = vand.u32 %v1756, 4294901760
    %1758 = vmatpush.msra.mxu0 %v1757
    %v1759 = vand.u32 %v93, 4294901760
    %v1760 = vsub.f32 %v93, %v1759
    %v1761 = vand.u32 %v1760, 4294901760
    %1762 = vmatpush.msra.mxu0 %v1761
    %v1763 = vand.u32 %v92, 4294901760
    %v1764 = vsub.f32 %v92, %v1763
    %v1765 = vand.u32 %v1764, 4294901760
    %1766 = vmatpush.msra.mxu0 %v1765
    %v1767 = vand.u32 %v91, 4294901760
    %v1768 = vsub.f32 %v91, %v1767
    %v1769 = vand.u32 %v1768, 4294901760
    %1770 = vmatpush.msra.mxu0 %v1769
    %v1771 = vand.u32 %v90, 4294901760
    %v1772 = vsub.f32 %v90, %v1771
    %v1773 = vand.u32 %v1772, 4294901760
    %1774 = vmatpush.msra.mxu0 %v1773
    %v1775 = vand.u32 %v89, 4294901760
    %v1776 = vsub.f32 %v89, %v1775
    %v1777 = vand.u32 %v1776, 4294901760
    %1778 = vmatpush.msra.mxu0 %v1777
    %v1779 = vand.u32 %v88, 4294901760
    %v1780 = vsub.f32 %v88, %v1779
    %v1781 = vand.u32 %v1780, 4294901760
    %1782 = vmatpush.msra.mxu0 %v1781
    %v1783 = vand.u32 %v87, 4294901760
    %v1784 = vsub.f32 %v87, %v1783
    %v1785 = vand.u32 %v1784, 4294901760
    %1786 = vmatpush.msra.mxu0 %v1785
    %v1787 = vand.u32 %v86, 4294901760
    %v1788 = vsub.f32 %v86, %v1787
    %v1789 = vand.u32 %v1788, 4294901760
    %1790 = vmatpush.msra.mxu0 %v1789
    %v1791 = vand.u32 %v19, 4294901760
    %1792 = vmatmul.f32.gmra.mxu0 %v1791
    %v1793 = vpop.f32.mrf.mxu0
    %v1794 = vadd.f32 %v1725, %v1793
    %1795 = vdwg.mxu0
    %v1796 = vand.u32 %v101, 4294901760
    %1797 = vmatpush.msra.mxu0 %v1796
    %v1798 = vand.u32 %v100, 4294901760
    %1799 = vmatpush.msra.mxu0 %v1798
    %v1800 = vand.u32 %v99, 4294901760
    %1801 = vmatpush.msra.mxu0 %v1800
    %v1802 = vand.u32 %v98, 4294901760
    %1803 = vmatpush.msra.mxu0 %v1802
    %v1804 = vand.u32 %v97, 4294901760
    %1805 = vmatpush.msra.mxu0 %v1804
    %v1806 = vand.u32 %v96, 4294901760
    %1807 = vmatpush.msra.mxu0 %v1806
    %v1808 = vand.u32 %v95, 4294901760
    %1809 = vmatpush.msra.mxu0 %v1808
    %v1810 = vand.u32 %v94, 4294901760
    %1811 = vmatpush.msra.mxu0 %v1810
    %v1812 = vand.u32 %v93, 4294901760
    %1813 = vmatpush.msra.mxu0 %v1812
    %v1814 = vand.u32 %v92, 4294901760
    %1815 = vmatpush.msra.mxu0 %v1814
    %v1816 = vand.u32 %v91, 4294901760
    %1817 = vmatpush.msra.mxu0 %v1816
    %v1818 = vand.u32 %v90, 4294901760
    %1819 = vmatpush.msra.mxu0 %v1818
    %v1820 = vand.u32 %v89, 4294901760
    %1821 = vmatpush.msra.mxu0 %v1820
    %v1822 = vand.u32 %v88, 4294901760
    %1823 = vmatpush.msra.mxu0 %v1822
    %v1824 = vand.u32 %v87, 4294901760
    %1825 = vmatpush.msra.mxu0 %v1824
    %v1826 = vand.u32 %v86, 4294901760
    %1827 = vmatpush.msra.mxu0 %v1826
    %v1828 = vand.u32 %v19, 4294901760
    %1829 = vmatmul.f32.gmra.mxu0 %v1828
    %v1830 = vpop.f32.mrf.mxu0
    %v1831 = vadd.f32 %v1794, %v1830
    %1832 = vdwg.mxu0
    %v1833 = vand.u32 %v117, 4294901760
    %1834 = vmatpush.msra.mxu0 %v1833
    %v1835 = vand.u32 %v116, 4294901760
    %1836 = vmatpush.msra.mxu0 %v1835
    %v1837 = vand.u32 %v115, 4294901760
    %1838 = vmatpush.msra.mxu0 %v1837
    %v1839 = vand.u32 %v114, 4294901760
    %1840 = vmatpush.msra.mxu0 %v1839
    %v1841 = vand.u32 %v113, 4294901760
    %1842 = vmatpush.msra.mxu0 %v1841
    %v1843 = vand.u32 %v112, 4294901760
    %1844 = vmatpush.msra.mxu0 %v1843
    %v1845 = vand.u32 %v111, 4294901760
    %1846 = vmatpush.msra.mxu0 %v1845
    %v1847 = vand.u32 %v110, 4294901760
    %1848 = vmatpush.msra.mxu0 %v1847
    %v1849 = vand.u32 %v109, 4294901760
    %1850 = vmatpush.msra.mxu0 %v1849
    %v1851 = vand.u32 %v108, 4294901760
    %1852 = vmatpush.msra.mxu0 %v1851
    %v1853 = vand.u32 %v107, 4294901760
    %1854 = vmatpush.msra.mxu0 %v1853
    %v1855 = vand.u32 %v106, 4294901760
    %1856 = vmatpush.msra.mxu0 %v1855
    %v1857 = vand.u32 %v105, 4294901760
    %1858 = vmatpush.msra.mxu0 %v1857
    %v1859 = vand.u32 %v104, 4294901760
    %1860 = vmatpush.msra.mxu0 %v1859
    %v1861 = vand.u32 %v103, 4294901760
    %1862 = vmatpush.msra.mxu0 %v1861
    %v1863 = vand.u32 %v102, 4294901760
    %1864 = vmatpush.msra.mxu0 %v1863
    %v1865 = vand.u32 %v20, 4294901760
    %v1866 = vsub.f32 %v20, %v1865
    %v1867 = vand.u32 %v1866, 4294901760
    %v1868 = vsub.f32 %v1866, %v1867
    %v1869 = vand.u32 %v1868, 4294901760
    %1870 = vmatmul.f32.gmra.mxu0 %v1869
    %v1871 = vpop.f32.mrf.mxu0
    %v1872 = vadd.f32 %v1831, %v1871
    %1873 = vdwg.mxu0
    %v1874 = vand.u32 %v117, 4294901760
    %v1875 = vsub.f32 %v117, %v1874
    %v1876 = vand.u32 %v1875, 4294901760
    %v1877 = vsub.f32 %v1875, %v1876
    %v1878 = vand.u32 %v1877, 4294901760
    %1879 = vmatpush.msra.mxu0 %v1878
    %v1880 = vand.u32 %v116, 4294901760
    %v1881 = vsub.f32 %v116, %v1880
    %v1882 = vand.u32 %v1881, 4294901760
    %v1883 = vsub.f32 %v1881, %v1882
    %v1884 = vand.u32 %v1883, 4294901760
    %1885 = vmatpush.msra.mxu0 %v1884
    %v1886 = vand.u32 %v115, 4294901760
    %v1887 = vsub.f32 %v115, %v1886
    %v1888 = vand.u32 %v1887, 4294901760
    %v1889 = vsub.f32 %v1887, %v1888
    %v1890 = vand.u32 %v1889, 4294901760
    %1891 = vmatpush.msra.mxu0 %v1890
    %v1892 = vand.u32 %v114, 4294901760
    %v1893 = vsub.f32 %v114, %v1892
    %v1894 = vand.u32 %v1893, 4294901760
    %v1895 = vsub.f32 %v1893, %v1894
    %v1896 = vand.u32 %v1895, 4294901760
    %1897 = vmatpush.msra.mxu0 %v1896
    %v1898 = vand.u32 %v113, 4294901760
    %v1899 = vsub.f32 %v113, %v1898
    %v1900 = vand.u32 %v1899, 4294901760
    %v1901 = vsub.f32 %v1899, %v1900
    %v1902 = vand.u32 %v1901, 4294901760
    %1903 = vmatpush.msra.mxu0 %v1902
    %v1904 = vand.u32 %v112, 4294901760
    %v1905 = vsub.f32 %v112, %v1904
    %v1906 = vand.u32 %v1905, 4294901760
    %v1907 = vsub.f32 %v1905, %v1906
    %v1908 = vand.u32 %v1907, 4294901760
    %1909 = vmatpush.msra.mxu0 %v1908
    %v1910 = vand.u32 %v111, 4294901760
    %v1911 = vsub.f32 %v111, %v1910
    %v1912 = vand.u32 %v1911, 4294901760
    %v1913 = vsub.f32 %v1911, %v1912
    %v1914 = vand.u32 %v1913, 4294901760
    %1915 = vmatpush.msra.mxu0 %v1914
    %v1916 = vand.u32 %v110, 4294901760
    %v1917 = vsub.f32 %v110, %v1916
    %v1918 = vand.u32 %v1917, 4294901760
    %v1919 = vsub.f32 %v1917, %v1918
    %v1920 = vand.u32 %v1919, 4294901760
    %1921 = vmatpush.msra.mxu0 %v1920
    %v1922 = vand.u32 %v109, 4294901760
    %v1923 = vsub.f32 %v109, %v1922
    %v1924 = vand.u32 %v1923, 4294901760
    %v1925 = vsub.f32 %v1923, %v1924
    %v1926 = vand.u32 %v1925, 4294901760
    %1927 = vmatpush.msra.mxu0 %v1926
    %v1928 = vand.u32 %v108, 4294901760
    %v1929 = vsub.f32 %v108, %v1928
    %v1930 = vand.u32 %v1929, 4294901760
    %v1931 = vsub.f32 %v1929, %v1930
    %v1932 = vand.u32 %v1931, 4294901760
    %1933 = vmatpush.msra.mxu0 %v1932
    %v1934 = vand.u32 %v107, 4294901760
    %v1935 = vsub.f32 %v107, %v1934
    %v1936 = vand.u32 %v1935, 4294901760
    %v1937 = vsub.f32 %v1935, %v1936
    %v1938 = vand.u32 %v1937, 4294901760
    %1939 = vmatpush.msra.mxu0 %v1938
    %v1940 = vand.u32 %v106, 4294901760
    %v1941 = vsub.f32 %v106, %v1940
    %v1942 = vand.u32 %v1941, 4294901760
    %v1943 = vsub.f32 %v1941, %v1942
    %v1944 = vand.u32 %v1943, 4294901760
    %1945 = vmatpush.msra.mxu0 %v1944
    %v1946 = vand.u32 %v105, 4294901760
    %v1947 = vsub.f32 %v105, %v1946
    %v1948 = vand.u32 %v1947, 4294901760
    %v1949 = vsub.f32 %v1947, %v1948
    %v1950 = vand.u32 %v1949, 4294901760
    %1951 = vmatpush.msra.mxu0 %v1950
    %v1952 = vand.u32 %v104, 4294901760
    %v1953 = vsub.f32 %v104, %v1952
    %v1954 = vand.u32 %v1953, 4294901760
    %v1955 = vsub.f32 %v1953, %v1954
    %v1956 = vand.u32 %v1955, 4294901760
    %1957 = vmatpush.msra.mxu0 %v1956
    %v1958 = vand.u32 %v103, 4294901760
    %v1959 = vsub.f32 %v103, %v1958
    %v1960 = vand.u32 %v1959, 4294901760
    %v1961 = vsub.f32 %v1959, %v1960
    %v1962 = vand.u32 %v1961, 4294901760
    %1963 = vmatpush.msra.mxu0 %v1962
    %v1964 = vand.u32 %v102, 4294901760
    %v1965 = vsub.f32 %v102, %v1964
    %v1966 = vand.u32 %v1965, 4294901760
    %v1967 = vsub.f32 %v1965, %v1966
    %v1968 = vand.u32 %v1967, 4294901760
    %1969 = vmatpush.msra.mxu0 %v1968
    %v1970 = vand.u32 %v20, 4294901760
    %1971 = vmatmul.f32.gmra.mxu0 %v1970
    %v1972 = vpop.f32.mrf.mxu0
    %v1973 = vadd.f32 %v1872, %v1972
    %1974 = vdwg.mxu0
    %v1975 = vand.u32 %v117, 4294901760
    %v1976 = vsub.f32 %v117, %v1975
    %1977 = vmatpush.msra.mxu0 %v1976
    %v1978 = vand.u32 %v116, 4294901760
    %v1979 = vsub.f32 %v116, %v1978
    %1980 = vmatpush.msra.mxu0 %v1979
    %v1981 = vand.u32 %v115, 4294901760
    %v1982 = vsub.f32 %v115, %v1981
    %1983 = vmatpush.msra.mxu0 %v1982
    %v1984 = vand.u32 %v114, 4294901760
    %v1985 = vsub.f32 %v114, %v1984
    %1986 = vmatpush.msra.mxu0 %v1985
    %v1987 = vand.u32 %v113, 4294901760
    %v1988 = vsub.f32 %v113, %v1987
    %1989 = vmatpush.msra.mxu0 %v1988
    %v1990 = vand.u32 %v112, 4294901760
    %v1991 = vsub.f32 %v112, %v1990
    %1992 = vmatpush.msra.mxu0 %v1991
    %v1993 = vand.u32 %v111, 4294901760
    %v1994 = vsub.f32 %v111, %v1993
    %1995 = vmatpush.msra.mxu0 %v1994
    %v1996 = vand.u32 %v110, 4294901760
    %v1997 = vsub.f32 %v110, %v1996
    %1998 = vmatpush.msra.mxu0 %v1997
    %v1999 = vand.u32 %v109, 4294901760
    %v2000 = vsub.f32 %v109, %v1999
    %2001 = vmatpush.msra.mxu0 %v2000
    %v2002 = vand.u32 %v108, 4294901760
    %v2003 = vsub.f32 %v108, %v2002
    %2004 = vmatpush.msra.mxu0 %v2003
    %v2005 = vand.u32 %v107, 4294901760
    %v2006 = vsub.f32 %v107, %v2005
    %2007 = vmatpush.msra.mxu0 %v2006
    %v2008 = vand.u32 %v106, 4294901760
    %v2009 = vsub.f32 %v106, %v2008
    %2010 = vmatpush.msra.mxu0 %v2009
    %v2011 = vand.u32 %v105, 4294901760
    %v2012 = vsub.f32 %v105, %v2011
    %2013 = vmatpush.msra.mxu0 %v2012
    %v2014 = vand.u32 %v104, 4294901760
    %v2015 = vsub.f32 %v104, %v2014
    %2016 = vmatpush.msra.mxu0 %v2015
    %v2017 = vand.u32 %v103, 4294901760
    %v2018 = vsub.f32 %v103, %v2017
    %2019 = vmatpush.msra.mxu0 %v2018
    %v2020 = vand.u32 %v102, 4294901760
    %v2021 = vsub.f32 %v102, %v2020
    %2022 = vmatpush.msra.mxu0 %v2021
    %v2023 = vand.u32 %v20, 4294901760
    %v2024 = vsub.f32 %v20, %v2023
    %2025 = vmatmul.f32.gmra.mxu0 %v2024
    %v2026 = vpop.f32.mrf.mxu0
    %v2027 = vadd.f32 %v1973, %v2026
    %2028 = vdwg.mxu0
    %v2029 = vand.u32 %v117, 4294901760
    %2030 = vmatpush.msra.mxu0 %v2029
    %v2031 = vand.u32 %v116, 4294901760
    %2032 = vmatpush.msra.mxu0 %v2031
    %v2033 = vand.u32 %v115, 4294901760
    %2034 = vmatpush.msra.mxu0 %v2033
    %v2035 = vand.u32 %v114, 4294901760
    %2036 = vmatpush.msra.mxu0 %v2035
    %v2037 = vand.u32 %v113, 4294901760
    %2038 = vmatpush.msra.mxu0 %v2037
    %v2039 = vand.u32 %v112, 4294901760
    %2040 = vmatpush.msra.mxu0 %v2039
    %v2041 = vand.u32 %v111, 4294901760
    %2042 = vmatpush.msra.mxu0 %v2041
    %v2043 = vand.u32 %v110, 4294901760
    %2044 = vmatpush.msra.mxu0 %v2043
    %v2045 = vand.u32 %v109, 4294901760
    %2046 = vmatpush.msra.mxu0 %v2045
    %v2047 = vand.u32 %v108, 4294901760
    %2048 = vmatpush.msra.mxu0 %v2047
    %v2049 = vand.u32 %v107, 4294901760
    %2050 = vmatpush.msra.mxu0 %v2049
    %v2051 = vand.u32 %v106, 4294901760
    %2052 = vmatpush.msra.mxu0 %v2051
    %v2053 = vand.u32 %v105, 4294901760
    %2054 = vmatpush.msra.mxu0 %v2053
    %v2055 = vand.u32 %v104, 4294901760
    %2056 = vmatpush.msra.mxu0 %v2055
    %v2057 = vand.u32 %v103, 4294901760
    %2058 = vmatpush.msra.mxu0 %v2057
    %v2059 = vand.u32 %v102, 4294901760
    %2060 = vmatpush.msra.mxu0 %v2059
    %v2061 = vand.u32 %v20, 4294901760
    %v2062 = vsub.f32 %v20, %v2061
    %v2063 = vand.u32 %v2062, 4294901760
    %2064 = vmatmul.f32.gmra.mxu0 %v2063
    %v2065 = vpop.f32.mrf.mxu0
    %v2066 = vadd.f32 %v2027, %v2065
    %2067 = vdwg.mxu0
    %v2068 = vand.u32 %v117, 4294901760
    %v2069 = vsub.f32 %v117, %v2068
    %v2070 = vand.u32 %v2069, 4294901760
    %2071 = vmatpush.msra.mxu0 %v2070
    %v2072 = vand.u32 %v116, 4294901760
    %v2073 = vsub.f32 %v116, %v2072
    %v2074 = vand.u32 %v2073, 4294901760
    %2075 = vmatpush.msra.mxu0 %v2074
    %v2076 = vand.u32 %v115, 4294901760
    %v2077 = vsub.f32 %v115, %v2076
    %v2078 = vand.u32 %v2077, 4294901760
    %2079 = vmatpush.msra.mxu0 %v2078
    %v2080 = vand.u32 %v114, 4294901760
    %v2081 = vsub.f32 %v114, %v2080
    %v2082 = vand.u32 %v2081, 4294901760
    %2083 = vmatpush.msra.mxu0 %v2082
    %v2084 = vand.u32 %v113, 4294901760
    %v2085 = vsub.f32 %v113, %v2084
    %v2086 = vand.u32 %v2085, 4294901760
    %2087 = vmatpush.msra.mxu0 %v2086
    %v2088 = vand.u32 %v112, 4294901760
    %v2089 = vsub.f32 %v112, %v2088
    %v2090 = vand.u32 %v2089, 4294901760
    %2091 = vmatpush.msra.mxu0 %v2090
    %v2092 = vand.u32 %v111, 4294901760
    %v2093 = vsub.f32 %v111, %v2092
    %v2094 = vand.u32 %v2093, 4294901760
    %2095 = vmatpush.msra.mxu0 %v2094
    %v2096 = vand.u32 %v110, 4294901760
    %v2097 = vsub.f32 %v110, %v2096
    %v2098 = vand.u32 %v2097, 4294901760
    %2099 = vmatpush.msra.mxu0 %v2098
    %v2100 = vand.u32 %v109, 4294901760
    %v2101 = vsub.f32 %v109, %v2100
    %v2102 = vand.u32 %v2101, 4294901760
    %2103 = vmatpush.msra.mxu0 %v2102
    %v2104 = vand.u32 %v108, 4294901760
    %v2105 = vsub.f32 %v108, %v2104
    %v2106 = vand.u32 %v2105, 4294901760
    %2107 = vmatpush.msra.mxu0 %v2106
    %v2108 = vand.u32 %v107, 4294901760
    %v2109 = vsub.f32 %v107, %v2108
    %v2110 = vand.u32 %v2109, 4294901760
    %2111 = vmatpush.msra.mxu0 %v2110
    %v2112 = vand.u32 %v106, 4294901760
    %v2113 = vsub.f32 %v106, %v2112
    %v2114 = vand.u32 %v2113, 4294901760
    %2115 = vmatpush.msra.mxu0 %v2114
    %v2116 = vand.u32 %v105, 4294901760
    %v2117 = vsub.f32 %v105, %v2116
    %v2118 = vand.u32 %v2117, 4294901760
    %2119 = vmatpush.msra.mxu0 %v2118
    %v2120 = vand.u32 %v104, 4294901760
    %v2121 = vsub.f32 %v104, %v2120
    %v2122 = vand.u32 %v2121, 4294901760
    %2123 = vmatpush.msra.mxu0 %v2122
    %v2124 = vand.u32 %v103, 4294901760
    %v2125 = vsub.f32 %v103, %v2124
    %v2126 = vand.u32 %v2125, 4294901760
    %2127 = vmatpush.msra.mxu0 %v2126
    %v2128 = vand.u32 %v102, 4294901760
    %v2129 = vsub.f32 %v102, %v2128
    %v2130 = vand.u32 %v2129, 4294901760
    %2131 = vmatpush.msra.mxu0 %v2130
    %v2132 = vand.u32 %v20, 4294901760
    %2133 = vmatmul.f32.gmra.mxu0 %v2132
    %v2134 = vpop.f32.mrf.mxu0
    %v2135 = vadd.f32 %v2066, %v2134
    %2136 = vdwg.mxu0
    %v2137 = vand.u32 %v117, 4294901760
    %2138 = vmatpush.msra.mxu0 %v2137
    %v2139 = vand.u32 %v116, 4294901760
    %2140 = vmatpush.msra.mxu0 %v2139
    %v2141 = vand.u32 %v115, 4294901760
    %2142 = vmatpush.msra.mxu0 %v2141
    %v2143 = vand.u32 %v114, 4294901760
    %2144 = vmatpush.msra.mxu0 %v2143
    %v2145 = vand.u32 %v113, 4294901760
    %2146 = vmatpush.msra.mxu0 %v2145
    %v2147 = vand.u32 %v112, 4294901760
    %2148 = vmatpush.msra.mxu0 %v2147
    %v2149 = vand.u32 %v111, 4294901760
    %2150 = vmatpush.msra.mxu0 %v2149
    %v2151 = vand.u32 %v110, 4294901760
    %2152 = vmatpush.msra.mxu0 %v2151
    %v2153 = vand.u32 %v109, 4294901760
    %2154 = vmatpush.msra.mxu0 %v2153
    %v2155 = vand.u32 %v108, 4294901760
    %2156 = vmatpush.msra.mxu0 %v2155
    %v2157 = vand.u32 %v107, 4294901760
    %2158 = vmatpush.msra.mxu0 %v2157
    %v2159 = vand.u32 %v106, 4294901760
    %2160 = vmatpush.msra.mxu0 %v2159
    %v2161 = vand.u32 %v105, 4294901760
    %2162 = vmatpush.msra.mxu0 %v2161
    %v2163 = vand.u32 %v104, 4294901760
    %2164 = vmatpush.msra.mxu0 %v2163
    %v2165 = vand.u32 %v103, 4294901760
    %2166 = vmatpush.msra.mxu0 %v2165
    %v2167 = vand.u32 %v102, 4294901760
    %2168 = vmatpush.msra.mxu0 %v2167
    %v2169 = vand.u32 %v20, 4294901760
    %2170 = vmatmul.f32.gmra.mxu0 %v2169
    %v2171 = vpop.f32.mrf.mxu0
    %v2172 = vadd.f32 %v2135, %v2171
    %2173 = vdwg.mxu0
    %2174 = vmatpush.msra.mxu0 0.0
    %2175 = vmatpush.msra.mxu0 0.0
    %2176 = vmatpush.msra.mxu0 0.0
    %2177 = vmatpush.msra.mxu0 0.0
    %2178 = vmatpush.msra.mxu0 0.0
    %2179 = vmatpush.msra.mxu0 0.0
    %2180 = vmatpush.msra.mxu0 0.0
    %2181 = vmatpush.msra.mxu0 0.0
    %2182 = vmatpush.msra.mxu0 0.0
    %2183 = vmatpush.msra.mxu0 0.0
    %2184 = vmatpush.msra.mxu0 0.0
    %2185 = vmatpush.msra.mxu0 0.0
    %2186 = vmatpush.msra.mxu0 0.0
    %2187 = vmatpush.msra.mxu0 0.0
    %v2188 = vand.u32 %v119, 4294901760
    %2189 = vmatpush.msra.mxu0 %v2188
    %v2190 = vand.u32 %v118, 4294901760
    %2191 = vmatpush.msra.mxu0 %v2190
    %v2192 = vand.u32 %v126, 4294901760
    %v2193 = vsub.f32 %v126, %v2192
    %v2194 = vand.u32 %v2193, 4294901760
    %v2195 = vsub.f32 %v2193, %v2194
    %v2196 = vand.u32 %v2195, 4294901760
    %2197 = vmatmul.f32.gmra.mxu0 %v2196
    %v2198 = vpop.f32.mrf.mxu0
    %v2199 = vadd.f32 %v2172, %v2198
    %2200 = vdwg.mxu0
    %2201 = vmatpush.msra.mxu0 0.0
    %2202 = vmatpush.msra.mxu0 0.0
    %2203 = vmatpush.msra.mxu0 0.0
    %2204 = vmatpush.msra.mxu0 0.0
    %2205 = vmatpush.msra.mxu0 0.0
    %2206 = vmatpush.msra.mxu0 0.0
    %2207 = vmatpush.msra.mxu0 0.0
    %2208 = vmatpush.msra.mxu0 0.0
    %2209 = vmatpush.msra.mxu0 0.0
    %2210 = vmatpush.msra.mxu0 0.0
    %2211 = vmatpush.msra.mxu0 0.0
    %2212 = vmatpush.msra.mxu0 0.0
    %2213 = vmatpush.msra.mxu0 0.0
    %2214 = vmatpush.msra.mxu0 0.0
    %v2215 = vand.u32 %v119, 4294901760
    %v2216 = vsub.f32 %v119, %v2215
    %v2217 = vand.u32 %v2216, 4294901760
    %v2218 = vsub.f32 %v2216, %v2217
    %v2219 = vand.u32 %v2218, 4294901760
    %2220 = vmatpush.msra.mxu0 %v2219
    %v2221 = vand.u32 %v118, 4294901760
    %v2222 = vsub.f32 %v118, %v2221
    %v2223 = vand.u32 %v2222, 4294901760
    %v2224 = vsub.f32 %v2222, %v2223
    %v2225 = vand.u32 %v2224, 4294901760
    %2226 = vmatpush.msra.mxu0 %v2225
    %v2227 = vand.u32 %v126, 4294901760
    %2228 = vmatmul.f32.gmra.mxu0 %v2227
    %v2229 = vpop.f32.mrf.mxu0
    %v2230 = vadd.f32 %v2199, %v2229
    %2231 = vdwg.mxu0
    %2232 = vmatpush.msra.mxu0 0.0
    %2233 = vmatpush.msra.mxu0 0.0
    %2234 = vmatpush.msra.mxu0 0.0
    %2235 = vmatpush.msra.mxu0 0.0
    %2236 = vmatpush.msra.mxu0 0.0
    %2237 = vmatpush.msra.mxu0 0.0
    %2238 = vmatpush.msra.mxu0 0.0
    %2239 = vmatpush.msra.mxu0 0.0
    %2240 = vmatpush.msra.mxu0 0.0
    %2241 = vmatpush.msra.mxu0 0.0
    %2242 = vmatpush.msra.mxu0 0.0
    %2243 = vmatpush.msra.mxu0 0.0
    %2244 = vmatpush.msra.mxu0 0.0
    %2245 = vmatpush.msra.mxu0 0.0
    %v2246 = vand.u32 %v119, 4294901760
    %v2247 = vsub.f32 %v119, %v2246
    %2248 = vmatpush.msra.mxu0 %v2247
    %v2249 = vand.u32 %v118, 4294901760
    %v2250 = vsub.f32 %v118, %v2249
    %2251 = vmatpush.msra.mxu0 %v2250
    %v2252 = vand.u32 %v126, 4294901760
    %v2253 = vsub.f32 %v126, %v2252
    %2254 = vmatmul.f32.gmra.mxu0 %v2253
    %v2255 = vpop.f32.mrf.mxu0
    %v2256 = vadd.f32 %v2230, %v2255
    %2257 = vdwg.mxu0
    %2258 = vmatpush.msra.mxu0 0.0
    %2259 = vmatpush.msra.mxu0 0.0
    %2260 = vmatpush.msra.mxu0 0.0
    %2261 = vmatpush.msra.mxu0 0.0
    %2262 = vmatpush.msra.mxu0 0.0
    %2263 = vmatpush.msra.mxu0 0.0
    %2264 = vmatpush.msra.mxu0 0.0
    %2265 = vmatpush.msra.mxu0 0.0
    %2266 = vmatpush.msra.mxu0 0.0
    %2267 = vmatpush.msra.mxu0 0.0
    %2268 = vmatpush.msra.mxu0 0.0
    %2269 = vmatpush.msra.mxu0 0.0
    %2270 = vmatpush.msra.mxu0 0.0
    %2271 = vmatpush.msra.mxu0 0.0
    %v2272 = vand.u32 %v119, 4294901760
    %2273 = vmatpush.msra.mxu0 %v2272
    %v2274 = vand.u32 %v118, 4294901760
    %2275 = vmatpush.msra.mxu0 %v2274
    %v2276 = vand.u32 %v126, 4294901760
    %v2277 = vsub.f32 %v126, %v2276
    %v2278 = vand.u32 %v2277, 4294901760
    %2279 = vmatmul.f32.gmra.mxu0 %v2278
    %v2280 = vpop.f32.mrf.mxu0
    %v2281 = vadd.f32 %v2256, %v2280
    %2282 = vdwg.mxu0
    %2283 = vmatpush.msra.mxu0 0.0
    %2284 = vmatpush.msra.mxu0 0.0
    %2285 = vmatpush.msra.mxu0 0.0
    %2286 = vmatpush.msra.mxu0 0.0
    %2287 = vmatpush.msra.mxu0 0.0
    %2288 = vmatpush.msra.mxu0 0.0
    %2289 = vmatpush.msra.mxu0 0.0
    %2290 = vmatpush.msra.mxu0 0.0
    %2291 = vmatpush.msra.mxu0 0.0
    %2292 = vmatpush.msra.mxu0 0.0
    %2293 = vmatpush.msra.mxu0 0.0
    %2294 = vmatpush.msra.mxu0 0.0
    %2295 = vmatpush.msra.mxu0 0.0
    %2296 = vmatpush.msra.mxu0 0.0
    %v2297 = vand.u32 %v119, 4294901760
    %v2298 = vsub.f32 %v119, %v2297
    %v2299 = vand.u32 %v2298, 4294901760
    %2300 = vmatpush.msra.mxu0 %v2299
    %v2301 = vand.u32 %v118, 4294901760
    %v2302 = vsub.f32 %v118, %v2301
    %v2303 = vand.u32 %v2302, 4294901760
    %2304 = vmatpush.msra.mxu0 %v2303
    %v2305 = vand.u32 %v126, 4294901760
    %2306 = vmatmul.f32.gmra.mxu0 %v2305
    %v2307 = vpop.f32.mrf.mxu0
    %v2308 = vadd.f32 %v2281, %v2307
    %2309 = vdwg.mxu0
    %2310 = vmatpush.msra.mxu0 0.0
    %2311 = vmatpush.msra.mxu0 0.0
    %2312 = vmatpush.msra.mxu0 0.0
    %2313 = vmatpush.msra.mxu0 0.0
    %2314 = vmatpush.msra.mxu0 0.0
    %2315 = vmatpush.msra.mxu0 0.0
    %2316 = vmatpush.msra.mxu0 0.0
    %2317 = vmatpush.msra.mxu0 0.0
    %2318 = vmatpush.msra.mxu0 0.0
    %2319 = vmatpush.msra.mxu0 0.0
    %2320 = vmatpush.msra.mxu0 0.0
    %2321 = vmatpush.msra.mxu0 0.0
    %2322 = vmatpush.msra.mxu0 0.0
    %2323 = vmatpush.msra.mxu0 0.0
    %v2324 = vand.u32 %v119, 4294901760
    %2325 = vmatpush.msra.mxu0 %v2324
    %v2326 = vand.u32 %v118, 4294901760
    %2327 = vmatpush.msra.mxu0 %v2326
    %v2328 = vand.u32 %v126, 4294901760
    %2329 = vmatmul.f32.gmra.mxu0 %v2328
    %v2330 = vpop.f32.mrf.mxu0
    %v2331 = vadd.f32 %v2308, %v2330
    %2332 = vdwg.mxu0
    %2333 = vst [vmem:[#allocation2] sm:$0xff] %v2331
    // Predicated region
    $region14: #{logistic_regression_forward.1} parent=1 // pred_check
      _
    $region15: #{logistic_regression_forward.1} parent=1 // pred_check_branch
      %2335 = sbr.rel (0) target = $region17
    $region16: #{logistic_regression_forward.1} parent=1 // pred_region
      %2337 = vsyncadd [#allocation3], 0
      %s2339 = sshll.u32 [#allocation2], 4
      %s2340 = int_to_ptr.vmem [resolvable:$true] %s2339
      %s2341 = sshll.u32 %s3, 4
      %s2342 = int_to_ptr.hbm [resolvable:$true] %s2341
      %2344 = dma.vmem_to_hbm [thread:$0]  %s2340, 128, %s2342, [#allocation3]
    $region17: #{logistic_regression_forward.1} parent=1 // pred_fallthru
      _
    // Predicated region
    $region18: #{logistic_regression_forward.1} parent=1 // pred_check
      _
    $region19: #{logistic_regression_forward.1} parent=1 // pred_check_branch
      %2346 = sbr.rel (0) target = $region21
    $region20: #{logistic_regression_forward.1} parent=1 // pred_region
      %2348 = dma.done [#allocation3], 128
    $region21: #{logistic_regression_forward.1} parent=1 // pred_fallthru
      _
    %2349 = vsyncpa [#allocation3], 1

</llo_original>
